<compile_context>
chip_gen: v7x
topology: tpu7x:2x2x1
jax: 0.10.0
libtpu: 0.0.40
codegen_flags: <defaults>
</compile_context>

<pallas_src>
import jax
import jax.numpy as jnp
from jax.experimental import pallas as pl
from jax.experimental.pallas import tpu as pltpu

SUBLANE = 8  # f32 sublane tile


def _round_up(n, m=SUBLANE):
    return ((n + m - 1) // m) * m


def _tree_level(p):
    lv = 1
    while ("level_%d" % lv) in p:
        lv += 1
    return lv


# ----------------------------------------------------------------------------
# Fused Tree kernel: one pallas_call for the whole aggregation tree.
# ----------------------------------------------------------------------------
def _build_tree_kernel(treedef, n_params, H, W):
    HW = H * W
    PADW = _round_up(W + 1, 128)  # zero halo width; 128-aligned concat seams

    def kernel(*refs):
        x_ref = refs[0]
        param_refs = refs[1:1 + n_params]
        o_ref = refs[1 + n_params]
        params = jax.tree_util.tree_unflatten(treedef, list(param_refs))

        # Column index of each flattened spatial position (shared by all convs).
        col = jax.lax.broadcasted_iota(jnp.int32, (1, HW), 1) % W
        mask_left = col >= 1           # reading w-1 is valid
        mask_right = col < (W - 1)     # reading w+1 is valid

        def conv3x3(x, w_ref, s_ref, b_ref, *, relu, residual=None):
            # x: (C, HW)  -> one im2col matmul  (Cout, 9C) @ (9C, HW)
            C = x.shape[0]
            zpad = jnp.zeros((C, PADW), jnp.float32)
            xp = jnp.concatenate([zpad, x, zpad], axis=1)   # (C, HW + 2*PADW)
            parts = []
            for dh in (-1, 0, 1):
                for dw in (-1, 0, 1):
                    s = dh * W + dw
                    # shifted[:, p] = x[:, p + s] (zero-filled outside the image)
                    t = xp[:, PADW + s:PADW + s + HW]
                    if dw == -1:
                        t = jnp.where(mask_left, t, 0.0)
                    elif dw == 1:
                        t = jnp.where(mask_right, t, 0.0)
                    parts.append(t)
            patches = jnp.concatenate(parts, axis=0)        # (9C, HW)
            y = jnp.dot(w_ref[...], patches,
                        preferred_element_type=jnp.float32)  # (Cout, HW)
            y = y * s_ref[...] + b_ref[...]                  # folded BN affine
            if residual is not None:
                y = y + residual
            return jnp.maximum(y, 0.0) if relu else y

        def conv1x1(x, w_ref, s_ref, b_ref, *, relu):
            y = jnp.dot(w_ref[...], x, preferred_element_type=jnp.float32)
            y = y * s_ref[...] + b_ref[...]
            return jnp.maximum(y, 0.0) if relu else y

        def block_apply(x, bp):
            out = conv3x3(x, bp["conv1_w"], bp["bn1_s"], bp["bn1_b"], relu=True)
            sc = (conv1x1(x, bp["sc_w"], bp["sc_bn_s"], bp["sc_bn_b"], relu=False)
                  if "sc_w" in bp else x)
            return conv3x3(out, bp["conv2_w"], bp["bn2_s"], bp["bn2_b"],
                           relu=True, residual=sc)

        def tree_apply(x, tp):
            level = _tree_level(tp)
            xs = []
            if level > 1:
                xs.append(block_apply(x, tp["prev_root"]))
                for i in reversed(range(1, level)):
                    x = tree_apply(x, tp["level_%d" % i])
                    xs.append(x)
            x = block_apply(x, tp["left"])
            xs.append(x)
            x = block_apply(x, tp["right"])
            xs.append(x)
            # Root: torch.cat(xs, 1) + 1x1 conv + BN + ReLU, fused in VMEM.
            xcat = jnp.concatenate(xs, axis=0)
            return conv1x1(xcat, tp["root"]["w"], tp["root"]["bn_s"],
                           tp["root"]["bn_b"], relu=True)

        out = tree_apply(x_ref[0], params)                   # (Cout, HW)
        o_ref[0] = out.astype(o_ref.dtype)

    return kernel


def tree_forward(x_nchw, params):
    """x_nchw: (B, Cin, H, W) f32 (PyTorch layout).  Returns (B, Cout, H, W)."""
    B, Cin, H, W = x_nchw.shape
    HW = H * W
    cin_p = _round_up(Cin)
    cout = params["root"]["w"].shape[0]
    assert cout % SUBLANE == 0, "out_channels must be a multiple of 8"

    x = x_nchw
    if cin_p > Cin:  # one-time channel pad so all in-kernel concats are aligned
        x = jnp.pad(x, ((0, 0), (0, cin_p - Cin), (0, 0), (0, 0)))
    x = x.reshape(B, cin_p, HW)

    flat, treedef = jax.tree_util.tree_flatten(params)
    kernel = _build_tree_kernel(treedef, len(flat), H, W)

    in_specs = [pl.BlockSpec((1, cin_p, HW), lambda b: (b, 0, 0))]
    in_specs += [pl.BlockSpec(p.shape, lambda b: (0, 0)) for p in flat]
    out_specs = pl.BlockSpec((1, cout, HW), lambda b: (b, 0, 0))

    out = pl.pallas_call(
        kernel,
        out_shape=jax.ShapeDtypeStruct((B, cout, HW), jnp.float32),
        grid=(B,),
        in_specs=in_specs,
        out_specs=out_specs,
        compiler_params=pltpu.CompilerParams(
            dimension_semantics=("parallel",)),
    )(x, *flat)
    return out.reshape(B, cout, H, W)


# ----------------------------------------------------------------------------
# Parameter initialization (deterministic, synthetic; eval-mode semantics).
# ----------------------------------------------------------------------------
def spectral_normalize(w, n_iter=5):
    """Miyato spectral norm: divide by top singular value of W.view(Cout, -1)."""
    m = w.reshape(w.shape[0], -1)
    u = jnp.ones((m.shape[0],), jnp.float32) / jnp.sqrt(float(m.shape[0]))
    v = None
    for _ in range(n_iter):
        v = m.T @ u
        v = v / (jnp.linalg.norm(v) + 1e-12)
        u = m @ v
        u = u / (jnp.linalg.norm(u) + 1e-12)
    sigma = u @ (m @ v)
    return w / sigma


def init_conv3x3(key, cin, cout, cin_pad):
    w = jax.random.normal(key, (cout, cin, 3, 3), jnp.float32) / jnp.sqrt(9.0 * cin)
    w = spectral_normalize(w)
    w = jnp.transpose(w, (0, 2, 3, 1))                    # (cout, kh, kw, cin)
    if cin_pad > cin:
        w = jnp.pad(w, ((0, 0), (0, 0), (0, 0), (0, cin_pad - cin)))
    return w.reshape(cout, 9 * cin_pad)                   # col = (kh*3+kw)*Cp + ci


def init_conv1x1(key, cin, cout, cin_pad):
    w = jax.random.normal(key, (cout, cin, 1, 1), jnp.float32) / jnp.sqrt(float(cin))
    w = spectral_normalize(w).reshape(cout, cin)
    if cin_pad > cin:
        w = jnp.pad(w, ((0, 0), (0, cin_pad - cin)))
    return w


def init_bn(key, c, eps=1e-5):
    k1, k2, k3, k4 = jax.random.split(key, 4)
    gamma = 1.0 + 0.1 * jax.random.normal(k1, (c,), jnp.float32)
    beta = 0.1 * jax.random.normal(k2, (c,), jnp.float32)
    mean = 0.1 * jax.random.normal(k3, (c,), jnp.float32)
    var = 1.0 + 0.1 * jax.random.uniform(k4, (c,), jnp.float32)
    scale = gamma / jnp.sqrt(var + eps)
    shift = beta - mean * scale
    return scale.reshape(c, 1), shift.reshape(c, 1)


def init_block(key, cin, cout, stride=1):
    cin_p = _round_up(cin)
    keys = jax.random.split(key, 6)
    p = {"conv1_w": init_conv3x3(keys[0], cin, cout, cin_p),
         "conv2_w": init_conv3x3(keys[2], cout, cout, cout)}
    p["bn1_s"], p["bn1_b"] = init_bn(keys[1], cout)
    p["bn2_s"], p["bn2_b"] = init_bn(keys[3], cout)
    if stride != 1 or cin != cout:
        p["sc_w"] = init_conv1x1(keys[4], cin, cout, cin_p)
        p["sc_bn_s"], p["sc_bn_b"] = init_bn(keys[5], cout)
    return p


def init_root(key, cin, cout):
    k1, k2 = jax.random.split(key)
    p = {"w": init_conv1x1(k1, cin, cout, cin)}
    p["bn_s"], p["bn_b"] = init_bn(k2, cout)
    return p


def init_tree(key, cin, cout, level=1, stride=1):
    p = {}
    if level == 1:
        k1, k2, k3 = jax.random.split(key, 3)
        p["root"] = init_root(k1, 2 * cout, cout)
        p["left"] = init_block(k2, cin, cout, stride)
        p["right"] = init_block(k3, cout, cout, 1)
    else:
        keys = jax.random.split(key, level + 4)
        p["root"] = init_root(keys[0], (level + 2) * cout, cout)
        for idx, i in enumerate(reversed(range(1, level))):
            p["level_%d" % i] = init_tree(keys[1 + idx], cin, cout,
                                          level=i, stride=stride)
        p["prev_root"] = init_block(keys[level], cin, cout, stride)
        p["left"] = init_block(keys[level + 1], cout, cout, 1)
        p["right"] = init_block(keys[level + 2], cout, cout, 1)
    return p


# ----------------------------------------------------------------------------
# Pure-JAX reference (NCHW) for correctness checking.
# ----------------------------------------------------------------------------
_HI = jax.lax.Precision.HIGHEST


def _conv3x3_ref(x, w_flat, s, b, *, relu, residual=None):
    B, C, H, W = x.shape
    Cout = w_flat.shape[0]
    xp = jnp.pad(x, ((0, 0), (0, 0), (1, 1), (1, 1)))
    parts = [xp[:, :, kh:kh + H, kw:kw + W] for kh in range(3) for kw in range(3)]
    patches = jnp.concatenate(parts, axis=1).reshape(B, 9 * C, H * W)
    y = jnp.einsum("ok,bkp->bop", w_flat, patches, precision=_HI)
    y = (y * s.reshape(1, Cout, 1) + b.reshape(1, Cout, 1)).reshape(B, Cout, H, W)
    if residual is not None:
        y = y + residual
    return jnp.maximum(y, 0.0) if relu else y


def _conv1x1_ref(x, w, s, b, *, relu):
    Cout = w.shape[0]
    y = jnp.einsum("oc,bchw->bohw", w, x, precision=_HI)
    y = y * s.reshape(1, Cout, 1, 1) + b.reshape(1, Cout, 1, 1)
    return jnp.maximum(y, 0.0) if relu else y


def _block_ref(x, bp):
    out = _conv3x3_ref(x, bp["conv1_w"], bp["bn1_s"], bp["bn1_b"], relu=True)
    sc = (_conv1x1_ref(x, bp["sc_w"], bp["sc_bn_s"], bp["sc_bn_b"], relu=False)
          if "sc_w" in bp else x)
    return _conv3x3_ref(out, bp["conv2_w"], bp["bn2_s"], bp["bn2_b"],
                        relu=True, residual=sc)


def tree_forward_ref(x_nchw, params):
    B, Cin, H, W = x_nchw.shape
    cin_p = _round_up(Cin)
    if cin_p > Cin:
        x_nchw = jnp.pad(x_nchw, ((0, 0), (0, cin_p - Cin), (0, 0), (0, 0)))

    def tree_ref(x, tp):
        level = _tree_level(tp)
        xs = []
        if level > 1:
            xs.append(_block_ref(x, tp["prev_root"]))
            for i in reversed(range(1, level)):
                x = tree_ref(x, tp["level_%d" % i])
                xs.append(x)
        x = _block_ref(x, tp["left"])
        xs.append(x)
        x = _block_ref(x, tp["right"])
        xs.append(x)
        xcat = jnp.concatenate(xs, axis=1)
        return _conv1x1_ref(xcat, tp["root"]["w"], tp["root"]["bn_s"],
                            tp["root"]["bn_b"], relu=True)

    return tree_ref(x_nchw, params)


# ----------------------------------------------------------------------------
if __name__ == "__main__":
    key = jax.random.PRNGKey(0)
    k_x, k_p1, k_p2 = jax.random.split(key, 3)

    B, Cin, H, W = 2, 4, 16, 16
    Cout = 8

    x_nchw = jax.random.normal(k_x, (B, Cin, H, W), jnp.float32)
    fwd = jax.jit(tree_forward)

    # level-1 tree (left block, right block, 2-way root).
    params1 = init_tree(k_p1, Cin, Cout, level=1, stride=1)
    out1 = jax.block_until_ready(fwd(x_nchw, params1))
    ref1 = tree_forward_ref(x_nchw, params1)
    assert out1.shape == (B, Cout, H, W), out1.shape
    assert bool(jnp.all(out1 >= 0.0)), "ReLU output must be non-negative"
    assert bool(jnp.all(jnp.isfinite(out1))), "non-finite values in output"
    assert bool(jnp.allclose(out1, ref1, atol=2e-2, rtol=2e-2)), \
        float(jnp.max(jnp.abs(out1 - ref1)))

    # level-2 tree (prev_root block, nested level-1 subtree, 4-way root concat).
    params2 = init_tree(k_p2, Cin, Cout, level=2, stride=1)
    out2 = jax.block_until_ready(fwd(x_nchw, params2))
    ref2 = tree_forward_ref(x_nchw, params2)
    assert out2.shape == (B, Cout, H, W), out2.shape
    assert bool(jnp.allclose(out2, ref2, atol=2e-2, rtol=2e-2)), \
        float(jnp.max(jnp.abs(out2 - ref2)))

    print("KERNEL_OK")
</pallas_src>

<mosaic_0001>
module attributes {stable_mosaic.version = 11 : i64} {
  func.func @kernel(%arg0: i32, %arg1: memref<1x8x256xf32, #tpu.memory_space<vmem>>, %arg2: memref<8x1xf32, #tpu.memory_space<vmem>>, %arg3: memref<8x1xf32, #tpu.memory_space<vmem>>, %arg4: memref<8x1xf32, #tpu.memory_space<vmem>>, %arg5: memref<8x1xf32, #tpu.memory_space<vmem>>, %arg6: memref<8x72xf32, #tpu.memory_space<vmem>>, %arg7: memref<8x72xf32, #tpu.memory_space<vmem>>, %arg8: memref<8x1xf32, #tpu.memory_space<vmem>>, %arg9: memref<8x1xf32, #tpu.memory_space<vmem>>, %arg10: memref<8x8xf32, #tpu.memory_space<vmem>>, %arg11: memref<8x1xf32, #tpu.memory_space<vmem>>, %arg12: memref<8x1xf32, #tpu.memory_space<vmem>>, %arg13: memref<8x1xf32, #tpu.memory_space<vmem>>, %arg14: memref<8x1xf32, #tpu.memory_space<vmem>>, %arg15: memref<8x72xf32, #tpu.memory_space<vmem>>, %arg16: memref<8x72xf32, #tpu.memory_space<vmem>>, %arg17: memref<8x1xf32, #tpu.memory_space<vmem>>, %arg18: memref<8x1xf32, #tpu.memory_space<vmem>>, %arg19: memref<8x16xf32, #tpu.memory_space<vmem>>, %arg20: memref<1x8x256xf32, #tpu.memory_space<vmem>>) attributes {dimension_semantics = [#tpu.dimension_semantics<parallel>], iteration_bounds = array<i64: 2>, scalar_prefetch = 0 : i64, scratch_operands = 0 : i64, tpu.core_type = #tpu.core_type<tc>, window_params = [{transform_indices = @transform_0, window_bounds = array<i64: 1, 8, 256>}, {pipeline_mode = #tpu.pipeline_mode<synchronous>, transform_indices = @transform_1, window_bounds = array<i64: 8, 1>}, {pipeline_mode = #tpu.pipeline_mode<synchronous>, transform_indices = @transform_2, window_bounds = array<i64: 8, 1>}, {pipeline_mode = #tpu.pipeline_mode<synchronous>, transform_indices = @transform_3, window_bounds = array<i64: 8, 1>}, {pipeline_mode = #tpu.pipeline_mode<synchronous>, transform_indices = @transform_4, window_bounds = array<i64: 8, 1>}, {pipeline_mode = #tpu.pipeline_mode<synchronous>, transform_indices = @transform_5, window_bounds = array<i64: 8, 72>}, {pipeline_mode = #tpu.pipeline_mode<synchronous>, transform_indices = @transform_6, window_bounds = array<i64: 8, 72>}, {pipeline_mode = #tpu.pipeline_mode<synchronous>, transform_indices = @transform_7, window_bounds = array<i64: 8, 1>}, {pipeline_mode = #tpu.pipeline_mode<synchronous>, transform_indices = @transform_8, window_bounds = array<i64: 8, 1>}, {pipeline_mode = #tpu.pipeline_mode<synchronous>, transform_indices = @transform_9, window_bounds = array<i64: 8, 8>}, {pipeline_mode = #tpu.pipeline_mode<synchronous>, transform_indices = @transform_10, window_bounds = array<i64: 8, 1>}, {pipeline_mode = #tpu.pipeline_mode<synchronous>, transform_indices = @transform_11, window_bounds = array<i64: 8, 1>}, {pipeline_mode = #tpu.pipeline_mode<synchronous>, transform_indices = @transform_12, window_bounds = array<i64: 8, 1>}, {pipeline_mode = #tpu.pipeline_mode<synchronous>, transform_indices = @transform_13, window_bounds = array<i64: 8, 1>}, {pipeline_mode = #tpu.pipeline_mode<synchronous>, transform_indices = @transform_14, window_bounds = array<i64: 8, 72>}, {pipeline_mode = #tpu.pipeline_mode<synchronous>, transform_indices = @transform_15, window_bounds = array<i64: 8, 72>}, {pipeline_mode = #tpu.pipeline_mode<synchronous>, transform_indices = @transform_16, window_bounds = array<i64: 8, 1>}, {pipeline_mode = #tpu.pipeline_mode<synchronous>, transform_indices = @transform_17, window_bounds = array<i64: 8, 1>}, {pipeline_mode = #tpu.pipeline_mode<synchronous>, transform_indices = @transform_18, window_bounds = array<i64: 8, 16>}, {transform_indices = @transform_19, window_bounds = array<i64: 1, 8, 256>}]} {
    %0 = tpu.iota {dimensions = array<i32: 1>} : vector<1x256xi32>
    %c16_i32 = arith.constant 16 : i32
    %c0_i32 = arith.constant 0 : i32
    %1 = arith.cmpi eq, %c16_i32, %c0_i32 : i32
    %c1_i32 = arith.constant 1 : i32
    %2 = arith.select %1, %c1_i32, %c16_i32 : i32
    %3 = vector.broadcast %2 : i32 to vector<1x256xi32>
    %4 = arith.remsi %0, %3 : vector<1x256xi32>
    %c0_i32_0 = arith.constant 0 : i32
    %5 = vector.broadcast %c0_i32_0 : i32 to vector<1x256xi32>
    %6 = arith.cmpi ne, %4, %5 : vector<1x256xi32>
    %c0_i32_1 = arith.constant 0 : i32
    %7 = vector.broadcast %c0_i32_1 : i32 to vector<1x256xi32>
    %8 = arith.cmpi slt, %4, %7 : vector<1x256xi32>
    %c0_i32_2 = arith.constant 0 : i32
    %9 = arith.cmpi slt, %2, %c0_i32_2 : i32
    %10 = vector.broadcast %9 : i1 to vector<1x256xi1>
    %11 = vector.broadcast %10 : vector<1x256xi1> to vector<1x256xi1>
    %12 = arith.xori %8, %11 : vector<1x256xi1>
    %13 = arith.andi %12, %6 : vector<1x256xi1>
    %14 = vector.broadcast %2 : i32 to vector<1x256xi32>
    %15 = arith.addi %4, %14 : vector<1x256xi32>
    %16 = arith.select %13, %15, %4 : vector<1x256xi1>, vector<1x256xi32>
    %c1_i32_3 = arith.constant 1 : i32
    %17 = vector.broadcast %c1_i32_3 : i32 to vector<1x256xi32>
    %18 = arith.cmpi sge, %16, %17 : vector<1x256xi32>
    %c15_i32 = arith.constant 15 : i32
    %19 = vector.broadcast %c15_i32 : i32 to vector<1x256xi32>
    %20 = arith.cmpi slt, %16, %19 : vector<1x256xi32>
    %c0 = arith.constant 0 : index
    %c0_4 = arith.constant 0 : index
    %c0_5 = arith.constant 0 : index
    %21 = vector.load %arg1[%c0, %c0_4, %c0_5] : memref<1x8x256xf32, #tpu.memory_space<vmem>>, vector<1x8x256xf32>
    %22 = vector.shape_cast %21 : vector<1x8x256xf32> to vector<8x256xf32>
    %cst = arith.constant 0.000000e+00 : f32
    %23 = vector.broadcast %cst : f32 to vector<8x128xf32>
    %24 = tpu.concatenate %23, %22, %23 in 1 : vector<8x128xf32>, vector<8x256xf32>, vector<8x128xf32> -> vector<8x512xf32>
    %25 = vector.extract_strided_slice %24 {offsets = [0, 111], sizes = [8, 256], strides = [1, 1]} : vector<8x512xf32> to vector<8x256xf32>
    %cst_6 = arith.constant 0.000000e+00 : f32
    %26 = vector.shape_cast %18 : vector<1x256xi1> to vector<1x256xi1>
    %27 = vector.broadcast %26 : vector<1x256xi1> to vector<8x256xi1>
    %28 = vector.broadcast %cst_6 : f32 to vector<8x256xf32>
    %29 = arith.select %27, %25, %28 : vector<8x256xi1>, vector<8x256xf32>
    %30 = vector.extract_strided_slice %24 {offsets = [0, 112], sizes = [8, 256], strides = [1, 1]} : vector<8x512xf32> to vector<8x256xf32>
    %31 = vector.extract_strided_slice %24 {offsets = [0, 113], sizes = [8, 256], strides = [1, 1]} : vector<8x512xf32> to vector<8x256xf32>
    %cst_7 = arith.constant 0.000000e+00 : f32
    %32 = vector.shape_cast %20 : vector<1x256xi1> to vector<1x256xi1>
    %33 = vector.broadcast %32 : vector<1x256xi1> to vector<8x256xi1>
    %34 = vector.broadcast %cst_7 : f32 to vector<8x256xf32>
    %35 = arith.select %33, %31, %34 : vector<8x256xi1>, vector<8x256xf32>
    %36 = vector.extract_strided_slice %24 {offsets = [0, 127], sizes = [8, 256], strides = [1, 1]} : vector<8x512xf32> to vector<8x256xf32>
    %cst_8 = arith.constant 0.000000e+00 : f32
    %37 = vector.shape_cast %18 : vector<1x256xi1> to vector<1x256xi1>
    %38 = vector.broadcast %37 : vector<1x256xi1> to vector<8x256xi1>
    %39 = vector.broadcast %cst_8 : f32 to vector<8x256xf32>
    %40 = arith.select %38, %36, %39 : vector<8x256xi1>, vector<8x256xf32>
    %41 = vector.extract_strided_slice %24 {offsets = [0, 128], sizes = [8, 256], strides = [1, 1]} : vector<8x512xf32> to vector<8x256xf32>
    %42 = vector.extract_strided_slice %24 {offsets = [0, 129], sizes = [8, 256], strides = [1, 1]} : vector<8x512xf32> to vector<8x256xf32>
    %cst_9 = arith.constant 0.000000e+00 : f32
    %43 = vector.shape_cast %20 : vector<1x256xi1> to vector<1x256xi1>
    %44 = vector.broadcast %43 : vector<1x256xi1> to vector<8x256xi1>
    %45 = vector.broadcast %cst_9 : f32 to vector<8x256xf32>
    %46 = arith.select %44, %42, %45 : vector<8x256xi1>, vector<8x256xf32>
    %47 = vector.extract_strided_slice %24 {offsets = [0, 143], sizes = [8, 256], strides = [1, 1]} : vector<8x512xf32> to vector<8x256xf32>
    %cst_10 = arith.constant 0.000000e+00 : f32
    %48 = vector.shape_cast %18 : vector<1x256xi1> to vector<1x256xi1>
    %49 = vector.broadcast %48 : vector<1x256xi1> to vector<8x256xi1>
    %50 = vector.broadcast %cst_10 : f32 to vector<8x256xf32>
    %51 = arith.select %49, %47, %50 : vector<8x256xi1>, vector<8x256xf32>
    %52 = vector.extract_strided_slice %24 {offsets = [0, 144], sizes = [8, 256], strides = [1, 1]} : vector<8x512xf32> to vector<8x256xf32>
    %53 = vector.extract_strided_slice %24 {offsets = [0, 145], sizes = [8, 256], strides = [1, 1]} : vector<8x512xf32> to vector<8x256xf32>
    %cst_11 = arith.constant 0.000000e+00 : f32
    %54 = vector.shape_cast %20 : vector<1x256xi1> to vector<1x256xi1>
    %55 = vector.broadcast %54 : vector<1x256xi1> to vector<8x256xi1>
    %56 = vector.broadcast %cst_11 : f32 to vector<8x256xf32>
    %57 = arith.select %55, %53, %56 : vector<8x256xi1>, vector<8x256xf32>
    %58 = tpu.concatenate %29, %30, %35, %40, %41, %46, %51, %52, %57 in 0 : vector<8x256xf32>, vector<8x256xf32>, vector<8x256xf32>, vector<8x256xf32>, vector<8x256xf32>, vector<8x256xf32>, vector<8x256xf32>, vector<8x256xf32>, vector<8x256xf32> -> vector<72x256xf32>
    %c0_12 = arith.constant 0 : index
    %c0_13 = arith.constant 0 : index
    %59 = vector.load %arg6[%c0_12, %c0_13] : memref<8x72xf32, #tpu.memory_space<vmem>>, vector<8x72xf32>
    %cst_14 = arith.constant dense<0.000000e+00> : vector<8x256xf32>
    %60 = tpu.matmul %59, %58, %cst_14 {dimension_numbers = #tpu.dot_dimension_numbers<[1], [0], [0], [1], [0, 0, 1, 1], [], []>} : vector<8x72xf32>, vector<72x256xf32>, vector<8x256xf32> -> vector<8x256xf32>
    %c0_15 = arith.constant 0 : index
    %c0_16 = arith.constant 0 : index
    %61 = vector.load %arg3[%c0_15, %c0_16] : memref<8x1xf32, #tpu.memory_space<vmem>>, vector<8x1xf32>
    %62 = vector.broadcast %61 : vector<8x1xf32> to vector<8x256xf32>
    %63 = arith.mulf %60, %62 : vector<8x256xf32>
    %c0_17 = arith.constant 0 : index
    %c0_18 = arith.constant 0 : index
    %64 = vector.load %arg2[%c0_17, %c0_18] : memref<8x1xf32, #tpu.memory_space<vmem>>, vector<8x1xf32>
    %65 = vector.broadcast %64 : vector<8x1xf32> to vector<8x256xf32>
    %66 = arith.addf %63, %65 : vector<8x256xf32>
    %cst_19 = arith.constant 0.000000e+00 : f32
    %67 = vector.broadcast %cst_19 : f32 to vector<8x256xf32>
    %68 = arith.maximumf %66, %67 : vector<8x256xf32>
    %c0_20 = arith.constant 0 : index
    %c0_21 = arith.constant 0 : index
    %69 = vector.load %arg10[%c0_20, %c0_21] : memref<8x8xf32, #tpu.memory_space<vmem>>, vector<8x8xf32>
    %cst_22 = arith.constant dense<0.000000e+00> : vector<8x256xf32>
    %70 = tpu.matmul %69, %22, %cst_22 {dimension_numbers = #tpu.dot_dimension_numbers<[1], [0], [0], [1], [0, 0, 1, 1], [], []>} : vector<8x8xf32>, vector<8x256xf32>, vector<8x256xf32> -> vector<8x256xf32>
    %c0_23 = arith.constant 0 : index
    %c0_24 = arith.constant 0 : index
    %71 = vector.load %arg9[%c0_23, %c0_24] : memref<8x1xf32, #tpu.memory_space<vmem>>, vector<8x1xf32>
    %72 = vector.broadcast %71 : vector<8x1xf32> to vector<8x256xf32>
    %73 = arith.mulf %70, %72 : vector<8x256xf32>
    %c0_25 = arith.constant 0 : index
    %c0_26 = arith.constant 0 : index
    %74 = vector.load %arg8[%c0_25, %c0_26] : memref<8x1xf32, #tpu.memory_space<vmem>>, vector<8x1xf32>
    %75 = vector.broadcast %74 : vector<8x1xf32> to vector<8x256xf32>
    %76 = arith.addf %73, %75 : vector<8x256xf32>
    %cst_27 = arith.constant 0.000000e+00 : f32
    %77 = vector.broadcast %cst_27 : f32 to vector<8x128xf32>
    %78 = tpu.concatenate %77, %68, %77 in 1 : vector<8x128xf32>, vector<8x256xf32>, vector<8x128xf32> -> vector<8x512xf32>
    %79 = vector.extract_strided_slice %78 {offsets = [0, 111], sizes = [8, 256], strides = [1, 1]} : vector<8x512xf32> to vector<8x256xf32>
    %cst_28 = arith.constant 0.000000e+00 : f32
    %80 = vector.shape_cast %18 : vector<1x256xi1> to vector<1x256xi1>
    %81 = vector.broadcast %80 : vector<1x256xi1> to vector<8x256xi1>
    %82 = vector.broadcast %cst_28 : f32 to vector<8x256xf32>
    %83 = arith.select %81, %79, %82 : vector<8x256xi1>, vector<8x256xf32>
    %84 = vector.extract_strided_slice %78 {offsets = [0, 112], sizes = [8, 256], strides = [1, 1]} : vector<8x512xf32> to vector<8x256xf32>
    %85 = vector.extract_strided_slice %78 {offsets = [0, 113], sizes = [8, 256], strides = [1, 1]} : vector<8x512xf32> to vector<8x256xf32>
    %cst_29 = arith.constant 0.000000e+00 : f32
    %86 = vector.shape_cast %20 : vector<1x256xi1> to vector<1x256xi1>
    %87 = vector.broadcast %86 : vector<1x256xi1> to vector<8x256xi1>
    %88 = vector.broadcast %cst_29 : f32 to vector<8x256xf32>
    %89 = arith.select %87, %85, %88 : vector<8x256xi1>, vector<8x256xf32>
    %90 = vector.extract_strided_slice %78 {offsets = [0, 127], sizes = [8, 256], strides = [1, 1]} : vector<8x512xf32> to vector<8x256xf32>
    %cst_30 = arith.constant 0.000000e+00 : f32
    %91 = vector.shape_cast %18 : vector<1x256xi1> to vector<1x256xi1>
    %92 = vector.broadcast %91 : vector<1x256xi1> to vector<8x256xi1>
    %93 = vector.broadcast %cst_30 : f32 to vector<8x256xf32>
    %94 = arith.select %92, %90, %93 : vector<8x256xi1>, vector<8x256xf32>
    %95 = vector.extract_strided_slice %78 {offsets = [0, 128], sizes = [8, 256], strides = [1, 1]} : vector<8x512xf32> to vector<8x256xf32>
    %96 = vector.extract_strided_slice %78 {offsets = [0, 129], sizes = [8, 256], strides = [1, 1]} : vector<8x512xf32> to vector<8x256xf32>
    %cst_31 = arith.constant 0.000000e+00 : f32
    %97 = vector.shape_cast %20 : vector<1x256xi1> to vector<1x256xi1>
    %98 = vector.broadcast %97 : vector<1x256xi1> to vector<8x256xi1>
    %99 = vector.broadcast %cst_31 : f32 to vector<8x256xf32>
    %100 = arith.select %98, %96, %99 : vector<8x256xi1>, vector<8x256xf32>
    %101 = vector.extract_strided_slice %78 {offsets = [0, 143], sizes = [8, 256], strides = [1, 1]} : vector<8x512xf32> to vector<8x256xf32>
    %cst_32 = arith.constant 0.000000e+00 : f32
    %102 = vector.shape_cast %18 : vector<1x256xi1> to vector<1x256xi1>
    %103 = vector.broadcast %102 : vector<1x256xi1> to vector<8x256xi1>
    %104 = vector.broadcast %cst_32 : f32 to vector<8x256xf32>
    %105 = arith.select %103, %101, %104 : vector<8x256xi1>, vector<8x256xf32>
    %106 = vector.extract_strided_slice %78 {offsets = [0, 144], sizes = [8, 256], strides = [1, 1]} : vector<8x512xf32> to vector<8x256xf32>
    %107 = vector.extract_strided_slice %78 {offsets = [0, 145], sizes = [8, 256], strides = [1, 1]} : vector<8x512xf32> to vector<8x256xf32>
    %cst_33 = arith.constant 0.000000e+00 : f32
    %108 = vector.shape_cast %20 : vector<1x256xi1> to vector<1x256xi1>
    %109 = vector.broadcast %108 : vector<1x256xi1> to vector<8x256xi1>
    %110 = vector.broadcast %cst_33 : f32 to vector<8x256xf32>
    %111 = arith.select %109, %107, %110 : vector<8x256xi1>, vector<8x256xf32>
    %112 = tpu.concatenate %83, %84, %89, %94, %95, %100, %105, %106, %111 in 0 : vector<8x256xf32>, vector<8x256xf32>, vector<8x256xf32>, vector<8x256xf32>, vector<8x256xf32>, vector<8x256xf32>, vector<8x256xf32>, vector<8x256xf32>, vector<8x256xf32> -> vector<72x256xf32>
    %c0_34 = arith.constant 0 : index
    %c0_35 = arith.constant 0 : index
    %113 = vector.load %arg7[%c0_34, %c0_35] : memref<8x72xf32, #tpu.memory_space<vmem>>, vector<8x72xf32>
    %cst_36 = arith.constant dense<0.000000e+00> : vector<8x256xf32>
    %114 = tpu.matmul %113, %112, %cst_36 {dimension_numbers = #tpu.dot_dimension_numbers<[1], [0], [0], [1], [0, 0, 1, 1], [], []>} : vector<8x72xf32>, vector<72x256xf32>, vector<8x256xf32> -> vector<8x256xf32>
    %c0_37 = arith.constant 0 : index
    %c0_38 = arith.constant 0 : index
    %115 = vector.load %arg5[%c0_37, %c0_38] : memref<8x1xf32, #tpu.memory_space<vmem>>, vector<8x1xf32>
    %116 = vector.broadcast %115 : vector<8x1xf32> to vector<8x256xf32>
    %117 = arith.mulf %114, %116 : vector<8x256xf32>
    %c0_39 = arith.constant 0 : index
    %c0_40 = arith.constant 0 : index
    %118 = vector.load %arg4[%c0_39, %c0_40] : memref<8x1xf32, #tpu.memory_space<vmem>>, vector<8x1xf32>
    %119 = vector.broadcast %118 : vector<8x1xf32> to vector<8x256xf32>
    %120 = arith.addf %117, %119 : vector<8x256xf32>
    %121 = arith.addf %120, %76 : vector<8x256xf32>
    %cst_41 = arith.constant 0.000000e+00 : f32
    %122 = vector.broadcast %cst_41 : f32 to vector<8x256xf32>
    %123 = arith.maximumf %121, %122 : vector<8x256xf32>
    %cst_42 = arith.constant 0.000000e+00 : f32
    %124 = vector.broadcast %cst_42 : f32 to vector<8x128xf32>
    %125 = tpu.concatenate %124, %123, %124 in 1 : vector<8x128xf32>, vector<8x256xf32>, vector<8x128xf32> -> vector<8x512xf32>
    %126 = vector.extract_strided_slice %125 {offsets = [0, 111], sizes = [8, 256], strides = [1, 1]} : vector<8x512xf32> to vector<8x256xf32>
    %cst_43 = arith.constant 0.000000e+00 : f32
    %127 = vector.shape_cast %18 : vector<1x256xi1> to vector<1x256xi1>
    %128 = vector.broadcast %127 : vector<1x256xi1> to vector<8x256xi1>
    %129 = vector.broadcast %cst_43 : f32 to vector<8x256xf32>
    %130 = arith.select %128, %126, %129 : vector<8x256xi1>, vector<8x256xf32>
    %131 = vector.extract_strided_slice %125 {offsets = [0, 112], sizes = [8, 256], strides = [1, 1]} : vector<8x512xf32> to vector<8x256xf32>
    %132 = vector.extract_strided_slice %125 {offsets = [0, 113], sizes = [8, 256], strides = [1, 1]} : vector<8x512xf32> to vector<8x256xf32>
    %cst_44 = arith.constant 0.000000e+00 : f32
    %133 = vector.shape_cast %20 : vector<1x256xi1> to vector<1x256xi1>
    %134 = vector.broadcast %133 : vector<1x256xi1> to vector<8x256xi1>
    %135 = vector.broadcast %cst_44 : f32 to vector<8x256xf32>
    %136 = arith.select %134, %132, %135 : vector<8x256xi1>, vector<8x256xf32>
    %137 = vector.extract_strided_slice %125 {offsets = [0, 127], sizes = [8, 256], strides = [1, 1]} : vector<8x512xf32> to vector<8x256xf32>
    %cst_45 = arith.constant 0.000000e+00 : f32
    %138 = vector.shape_cast %18 : vector<1x256xi1> to vector<1x256xi1>
    %139 = vector.broadcast %138 : vector<1x256xi1> to vector<8x256xi1>
    %140 = vector.broadcast %cst_45 : f32 to vector<8x256xf32>
    %141 = arith.select %139, %137, %140 : vector<8x256xi1>, vector<8x256xf32>
    %142 = vector.extract_strided_slice %125 {offsets = [0, 128], sizes = [8, 256], strides = [1, 1]} : vector<8x512xf32> to vector<8x256xf32>
    %143 = vector.extract_strided_slice %125 {offsets = [0, 129], sizes = [8, 256], strides = [1, 1]} : vector<8x512xf32> to vector<8x256xf32>
    %cst_46 = arith.constant 0.000000e+00 : f32
    %144 = vector.shape_cast %20 : vector<1x256xi1> to vector<1x256xi1>
    %145 = vector.broadcast %144 : vector<1x256xi1> to vector<8x256xi1>
    %146 = vector.broadcast %cst_46 : f32 to vector<8x256xf32>
    %147 = arith.select %145, %143, %146 : vector<8x256xi1>, vector<8x256xf32>
    %148 = vector.extract_strided_slice %125 {offsets = [0, 143], sizes = [8, 256], strides = [1, 1]} : vector<8x512xf32> to vector<8x256xf32>
    %cst_47 = arith.constant 0.000000e+00 : f32
    %149 = vector.shape_cast %18 : vector<1x256xi1> to vector<1x256xi1>
    %150 = vector.broadcast %149 : vector<1x256xi1> to vector<8x256xi1>
    %151 = vector.broadcast %cst_47 : f32 to vector<8x256xf32>
    %152 = arith.select %150, %148, %151 : vector<8x256xi1>, vector<8x256xf32>
    %153 = vector.extract_strided_slice %125 {offsets = [0, 144], sizes = [8, 256], strides = [1, 1]} : vector<8x512xf32> to vector<8x256xf32>
    %154 = vector.extract_strided_slice %125 {offsets = [0, 145], sizes = [8, 256], strides = [1, 1]} : vector<8x512xf32> to vector<8x256xf32>
    %cst_48 = arith.constant 0.000000e+00 : f32
    %155 = vector.shape_cast %20 : vector<1x256xi1> to vector<1x256xi1>
    %156 = vector.broadcast %155 : vector<1x256xi1> to vector<8x256xi1>
    %157 = vector.broadcast %cst_48 : f32 to vector<8x256xf32>
    %158 = arith.select %156, %154, %157 : vector<8x256xi1>, vector<8x256xf32>
    %159 = tpu.concatenate %130, %131, %136, %141, %142, %147, %152, %153, %158 in 0 : vector<8x256xf32>, vector<8x256xf32>, vector<8x256xf32>, vector<8x256xf32>, vector<8x256xf32>, vector<8x256xf32>, vector<8x256xf32>, vector<8x256xf32>, vector<8x256xf32> -> vector<72x256xf32>
    %c0_49 = arith.constant 0 : index
    %c0_50 = arith.constant 0 : index
    %160 = vector.load %arg15[%c0_49, %c0_50] : memref<8x72xf32, #tpu.memory_space<vmem>>, vector<8x72xf32>
    %cst_51 = arith.constant dense<0.000000e+00> : vector<8x256xf32>
    %161 = tpu.matmul %160, %159, %cst_51 {dimension_numbers = #tpu.dot_dimension_numbers<[1], [0], [0], [1], [0, 0, 1, 1], [], []>} : vector<8x72xf32>, vector<72x256xf32>, vector<8x256xf32> -> vector<8x256xf32>
    %c0_52 = arith.constant 0 : index
    %c0_53 = arith.constant 0 : index
    %162 = vector.load %arg12[%c0_52, %c0_53] : memref<8x1xf32, #tpu.memory_space<vmem>>, vector<8x1xf32>
    %163 = vector.broadcast %162 : vector<8x1xf32> to vector<8x256xf32>
    %164 = arith.mulf %161, %163 : vector<8x256xf32>
    %c0_54 = arith.constant 0 : index
    %c0_55 = arith.constant 0 : index
    %165 = vector.load %arg11[%c0_54, %c0_55] : memref<8x1xf32, #tpu.memory_space<vmem>>, vector<8x1xf32>
    %166 = vector.broadcast %165 : vector<8x1xf32> to vector<8x256xf32>
    %167 = arith.addf %164, %166 : vector<8x256xf32>
    %cst_56 = arith.constant 0.000000e+00 : f32
    %168 = vector.broadcast %cst_56 : f32 to vector<8x256xf32>
    %169 = arith.maximumf %167, %168 : vector<8x256xf32>
    %cst_57 = arith.constant 0.000000e+00 : f32
    %170 = vector.broadcast %cst_57 : f32 to vector<8x128xf32>
    %171 = tpu.concatenate %170, %169, %170 in 1 : vector<8x128xf32>, vector<8x256xf32>, vector<8x128xf32> -> vector<8x512xf32>
    %172 = vector.extract_strided_slice %171 {offsets = [0, 111], sizes = [8, 256], strides = [1, 1]} : vector<8x512xf32> to vector<8x256xf32>
    %cst_58 = arith.constant 0.000000e+00 : f32
    %173 = vector.shape_cast %18 : vector<1x256xi1> to vector<1x256xi1>
    %174 = vector.broadcast %173 : vector<1x256xi1> to vector<8x256xi1>
    %175 = vector.broadcast %cst_58 : f32 to vector<8x256xf32>
    %176 = arith.select %174, %172, %175 : vector<8x256xi1>, vector<8x256xf32>
    %177 = vector.extract_strided_slice %171 {offsets = [0, 112], sizes = [8, 256], strides = [1, 1]} : vector<8x512xf32> to vector<8x256xf32>
    %178 = vector.extract_strided_slice %171 {offsets = [0, 113], sizes = [8, 256], strides = [1, 1]} : vector<8x512xf32> to vector<8x256xf32>
    %cst_59 = arith.constant 0.000000e+00 : f32
    %179 = vector.shape_cast %20 : vector<1x256xi1> to vector<1x256xi1>
    %180 = vector.broadcast %179 : vector<1x256xi1> to vector<8x256xi1>
    %181 = vector.broadcast %cst_59 : f32 to vector<8x256xf32>
    %182 = arith.select %180, %178, %181 : vector<8x256xi1>, vector<8x256xf32>
    %183 = vector.extract_strided_slice %171 {offsets = [0, 127], sizes = [8, 256], strides = [1, 1]} : vector<8x512xf32> to vector<8x256xf32>
    %cst_60 = arith.constant 0.000000e+00 : f32
    %184 = vector.shape_cast %18 : vector<1x256xi1> to vector<1x256xi1>
    %185 = vector.broadcast %184 : vector<1x256xi1> to vector<8x256xi1>
    %186 = vector.broadcast %cst_60 : f32 to vector<8x256xf32>
    %187 = arith.select %185, %183, %186 : vector<8x256xi1>, vector<8x256xf32>
    %188 = vector.extract_strided_slice %171 {offsets = [0, 128], sizes = [8, 256], strides = [1, 1]} : vector<8x512xf32> to vector<8x256xf32>
    %189 = vector.extract_strided_slice %171 {offsets = [0, 129], sizes = [8, 256], strides = [1, 1]} : vector<8x512xf32> to vector<8x256xf32>
    %cst_61 = arith.constant 0.000000e+00 : f32
    %190 = vector.shape_cast %20 : vector<1x256xi1> to vector<1x256xi1>
    %191 = vector.broadcast %190 : vector<1x256xi1> to vector<8x256xi1>
    %192 = vector.broadcast %cst_61 : f32 to vector<8x256xf32>
    %193 = arith.select %191, %189, %192 : vector<8x256xi1>, vector<8x256xf32>
    %194 = vector.extract_strided_slice %171 {offsets = [0, 143], sizes = [8, 256], strides = [1, 1]} : vector<8x512xf32> to vector<8x256xf32>
    %cst_62 = arith.constant 0.000000e+00 : f32
    %195 = vector.shape_cast %18 : vector<1x256xi1> to vector<1x256xi1>
    %196 = vector.broadcast %195 : vector<1x256xi1> to vector<8x256xi1>
    %197 = vector.broadcast %cst_62 : f32 to vector<8x256xf32>
    %198 = arith.select %196, %194, %197 : vector<8x256xi1>, vector<8x256xf32>
    %199 = vector.extract_strided_slice %171 {offsets = [0, 144], sizes = [8, 256], strides = [1, 1]} : vector<8x512xf32> to vector<8x256xf32>
    %200 = vector.extract_strided_slice %171 {offsets = [0, 145], sizes = [8, 256], strides = [1, 1]} : vector<8x512xf32> to vector<8x256xf32>
    %cst_63 = arith.constant 0.000000e+00 : f32
    %201 = vector.shape_cast %20 : vector<1x256xi1> to vector<1x256xi1>
    %202 = vector.broadcast %201 : vector<1x256xi1> to vector<8x256xi1>
    %203 = vector.broadcast %cst_63 : f32 to vector<8x256xf32>
    %204 = arith.select %202, %200, %203 : vector<8x256xi1>, vector<8x256xf32>
    %205 = tpu.concatenate %176, %177, %182, %187, %188, %193, %198, %199, %204 in 0 : vector<8x256xf32>, vector<8x256xf32>, vector<8x256xf32>, vector<8x256xf32>, vector<8x256xf32>, vector<8x256xf32>, vector<8x256xf32>, vector<8x256xf32>, vector<8x256xf32> -> vector<72x256xf32>
    %c0_64 = arith.constant 0 : index
    %c0_65 = arith.constant 0 : index
    %206 = vector.load %arg16[%c0_64, %c0_65] : memref<8x72xf32, #tpu.memory_space<vmem>>, vector<8x72xf32>
    %cst_66 = arith.constant dense<0.000000e+00> : vector<8x256xf32>
    %207 = tpu.matmul %206, %205, %cst_66 {dimension_numbers = #tpu.dot_dimension_numbers<[1], [0], [0], [1], [0, 0, 1, 1], [], []>} : vector<8x72xf32>, vector<72x256xf32>, vector<8x256xf32> -> vector<8x256xf32>
    %c0_67 = arith.constant 0 : index
    %c0_68 = arith.constant 0 : index
    %208 = vector.load %arg14[%c0_67, %c0_68] : memref<8x1xf32, #tpu.memory_space<vmem>>, vector<8x1xf32>
    %209 = vector.broadcast %208 : vector<8x1xf32> to vector<8x256xf32>
    %210 = arith.mulf %207, %209 : vector<8x256xf32>
    %c0_69 = arith.constant 0 : index
    %c0_70 = arith.constant 0 : index
    %211 = vector.load %arg13[%c0_69, %c0_70] : memref<8x1xf32, #tpu.memory_space<vmem>>, vector<8x1xf32>
    %212 = vector.broadcast %211 : vector<8x1xf32> to vector<8x256xf32>
    %213 = arith.addf %210, %212 : vector<8x256xf32>
    %214 = arith.addf %213, %123 : vector<8x256xf32>
    %cst_71 = arith.constant 0.000000e+00 : f32
    %215 = vector.broadcast %cst_71 : f32 to vector<8x256xf32>
    %216 = arith.maximumf %214, %215 : vector<8x256xf32>
    %217 = tpu.concatenate %123, %216 in 0 : vector<8x256xf32>, vector<8x256xf32> -> vector<16x256xf32>
    %c0_72 = arith.constant 0 : index
    %c0_73 = arith.constant 0 : index
    %218 = vector.load %arg19[%c0_72, %c0_73] : memref<8x16xf32, #tpu.memory_space<vmem>>, vector<8x16xf32>
    %cst_74 = arith.constant dense<0.000000e+00> : vector<8x256xf32>
    %219 = tpu.matmul %218, %217, %cst_74 {dimension_numbers = #tpu.dot_dimension_numbers<[1], [0], [0], [1], [0, 0, 1, 1], [], []>} : vector<8x16xf32>, vector<16x256xf32>, vector<8x256xf32> -> vector<8x256xf32>
    %c0_75 = arith.constant 0 : index
    %c0_76 = arith.constant 0 : index
    %220 = vector.load %arg18[%c0_75, %c0_76] : memref<8x1xf32, #tpu.memory_space<vmem>>, vector<8x1xf32>
    %221 = vector.broadcast %220 : vector<8x1xf32> to vector<8x256xf32>
    %222 = arith.mulf %219, %221 : vector<8x256xf32>
    %c0_77 = arith.constant 0 : index
    %c0_78 = arith.constant 0 : index
    %223 = vector.load %arg17[%c0_77, %c0_78] : memref<8x1xf32, #tpu.memory_space<vmem>>, vector<8x1xf32>
    %224 = vector.broadcast %223 : vector<8x1xf32> to vector<8x256xf32>
    %225 = arith.addf %222, %224 : vector<8x256xf32>
    %cst_79 = arith.constant 0.000000e+00 : f32
    %226 = vector.broadcast %cst_79 : f32 to vector<8x256xf32>
    %227 = arith.maximumf %225, %226 : vector<8x256xf32>
    %c0_80 = arith.constant 0 : index
    %c0_81 = arith.constant 0 : index
    %c0_82 = arith.constant 0 : index
    %228 = vector.load %arg20[%c0_80, %c0_81, %c0_82] : memref<1x8x256xf32, #tpu.memory_space<vmem>>, vector<1x8x256xf32>
    %229 = vector.shape_cast %228 : vector<1x8x256xf32> to vector<8x256xf32>
    %230 = vector.shape_cast %227 : vector<8x256xf32> to vector<1x8x256xf32>
    tpu.vector_store %arg20[%c0_80, %c0_81, %c0_82], %230 {strides = array<i32>} : memref<1x8x256xf32, #tpu.memory_space<vmem>>, vector<1x8x256xf32>,
    return
  }
  func.func @transform_0(%arg0: i32) -> (i32, i32, i32) {
    %c0_i32 = arith.constant 0 : i32
    %c0_i32_0 = arith.constant 0 : i32
    %c0_i32_1 = arith.constant 0 : i32
    return %arg0, %c0_i32, %c0_i32_0 : i32, i32, i32
  }
  func.func @transform_1(%arg0: i32) -> (i32, i32) {
    %c0_i32 = arith.constant 0 : i32
    %c0_i32_0 = arith.constant 0 : i32
    %c0_i32_1 = arith.constant 0 : i32
    return %c0_i32, %c0_i32_0 : i32, i32
  }
  func.func @transform_2(%arg0: i32) -> (i32, i32) {
    %c0_i32 = arith.constant 0 : i32
    %c0_i32_0 = arith.constant 0 : i32
    %c0_i32_1 = arith.constant 0 : i32
    return %c0_i32, %c0_i32_0 : i32, i32
  }
  func.func @transform_3(%arg0: i32) -> (i32, i32) {
    %c0_i32 = arith.constant 0 : i32
    %c0_i32_0 = arith.constant 0 : i32
    %c0_i32_1 = arith.constant 0 : i32
    return %c0_i32, %c0_i32_0 : i32, i32
  }
  func.func @transform_4(%arg0: i32) -> (i32, i32) {
    %c0_i32 = arith.constant 0 : i32
    %c0_i32_0 = arith.constant 0 : i32
    %c0_i32_1 = arith.constant 0 : i32
    return %c0_i32, %c0_i32_0 : i32, i32
  }
  func.func @transform_5(%arg0: i32) -> (i32, i32) {
    %c0_i32 = arith.constant 0 : i32
    %c0_i32_0 = arith.constant 0 : i32
    %c0_i32_1 = arith.constant 0 : i32
    return %c0_i32, %c0_i32_0 : i32, i32
  }
  func.func @transform_6(%arg0: i32) -> (i32, i32) {
    %c0_i32 = arith.constant 0 : i32
    %c0_i32_0 = arith.constant 0 : i32
    %c0_i32_1 = arith.constant 0 : i32
    return %c0_i32, %c0_i32_0 : i32, i32
  }
  func.func @transform_7(%arg0: i32) -> (i32, i32) {
    %c0_i32 = arith.constant 0 : i32
    %c0_i32_0 = arith.constant 0 : i32
    %c0_i32_1 = arith.constant 0 : i32
    return %c0_i32, %c0_i32_0 : i32, i32
  }
  func.func @transform_8(%arg0: i32) -> (i32, i32) {
    %c0_i32 = arith.constant 0 : i32
    %c0_i32_0 = arith.constant 0 : i32
    %c0_i32_1 = arith.constant 0 : i32
    return %c0_i32, %c0_i32_0 : i32, i32
  }
  func.func @transform_9(%arg0: i32) -> (i32, i32) {
    %c0_i32 = arith.constant 0 : i32
    %c0_i32_0 = arith.constant 0 : i32
    %c0_i32_1 = arith.constant 0 : i32
    return %c0_i32, %c0_i32_0 : i32, i32
  }
  func.func @transform_10(%arg0: i32) -> (i32, i32) {
    %c0_i32 = arith.constant 0 : i32
    %c0_i32_0 = arith.constant 0 : i32
    %c0_i32_1 = arith.constant 0 : i32
    return %c0_i32, %c0_i32_0 : i32, i32
  }
  func.func @transform_11(%arg0: i32) -> (i32, i32) {
    %c0_i32 = arith.constant 0 : i32
    %c0_i32_0 = arith.constant 0 : i32
    %c0_i32_1 = arith.constant 0 : i32
    return %c0_i32, %c0_i32_0 : i32, i32
  }
  func.func @transform_12(%arg0: i32) -> (i32, i32) {
    %c0_i32 = arith.constant 0 : i32
    %c0_i32_0 = arith.constant 0 : i32
    %c0_i32_1 = arith.constant 0 : i32
    return %c0_i32, %c0_i32_0 : i32, i32
  }
  func.func @transform_13(%arg0: i32) -> (i32, i32) {
    %c0_i32 = arith.constant 0 : i32
    %c0_i32_0 = arith.constant 0 : i32
    %c0_i32_1 = arith.constant 0 : i32
    return %c0_i32, %c0_i32_0 : i32, i32
  }
  func.func @transform_14(%arg0: i32) -> (i32, i32) {
    %c0_i32 = arith.constant 0 : i32
    %c0_i32_0 = arith.constant 0 : i32
    %c0_i32_1 = arith.constant 0 : i32
    return %c0_i32, %c0_i32_0 : i32, i32
  }
  func.func @transform_15(%arg0: i32) -> (i32, i32) {
    %c0_i32 = arith.constant 0 : i32
    %c0_i32_0 = arith.constant 0 : i32
    %c0_i32_1 = arith.constant 0 : i32
    return %c0_i32, %c0_i32_0 : i32, i32
  }
  func.func @transform_16(%arg0: i32) -> (i32, i32) {
    %c0_i32 = arith.constant 0 : i32
    %c0_i32_0 = arith.constant 0 : i32
    %c0_i32_1 = arith.constant 0 : i32
    return %c0_i32, %c0_i32_0 : i32, i32
  }
  func.func @transform_17(%arg0: i32) -> (i32, i32) {
    %c0_i32 = arith.constant 0 : i32
    %c0_i32_0 = arith.constant 0 : i32
    %c0_i32_1 = arith.constant 0 : i32
    return %c0_i32, %c0_i32_0 : i32, i32
  }
  func.func @transform_18(%arg0: i32) -> (i32, i32) {
    %c0_i32 = arith.constant 0 : i32
    %c0_i32_0 = arith.constant 0 : i32
    %c0_i32_1 = arith.constant 0 : i32
    return %c0_i32, %c0_i32_0 : i32, i32
  }
  func.func @transform_19(%arg0: i32) -> (i32, i32, i32) {
    %c0_i32 = arith.constant 0 : i32
    %c0_i32_0 = arith.constant 0 : i32
    %c0_i32_1 = arith.constant 0 : i32
    return %arg0, %c0_i32, %c0_i32_0 : i32, i32, i32
  }
}

</mosaic_0001>

<llo_original>
// kernel: tree_forward.1
$region0: #{tree_forward.1}
  #allocation0 [shape = 'u32[]', space=smem, size = 0x4, offset = 0x4, fixed_abs, tag = 'smem constant byte address 0x4 - core index']
  #allocation1 [shape = 'u32[144,128]{1,0:T(1,128)}', space=vmem, size = 0x12000, scoped, tag = 'internal scratch']
  %s0 = inlined_call_operand.vmem [shape: f32[2,8,256], index: 0, kind: input, shape index: {}]
  %s1 = inlined_call_operand.vmem [shape: f32[8,1], index: 1, kind: input, shape index: {}]
  %s2 = inlined_call_operand.vmem [shape: f32[8,1], index: 2, kind: input, shape index: {}]
  %s3 = inlined_call_operand.vmem [shape: f32[8,1], index: 3, kind: input, shape index: {}]
  %s4 = inlined_call_operand.vmem [shape: f32[8,1], index: 4, kind: input, shape index: {}]
  %s5 = inlined_call_operand.vmem [shape: f32[8,72], index: 5, kind: input, shape index: {}]
  %s6 = inlined_call_operand.vmem [shape: f32[8,72], index: 6, kind: input, shape index: {}]
  %s7 = inlined_call_operand.vmem [shape: f32[8,1], index: 7, kind: input, shape index: {}]
  %s8 = inlined_call_operand.vmem [shape: f32[8,1], index: 8, kind: input, shape index: {}]
  %s9 = inlined_call_operand.vmem [shape: f32[8,8], index: 9, kind: input, shape index: {}]
  %s10 = inlined_call_operand.vmem [shape: f32[8,1], index: 10, kind: input, shape index: {}]
  %s11 = inlined_call_operand.vmem [shape: f32[8,1], index: 11, kind: input, shape index: {}]
  %s12 = inlined_call_operand.vmem [shape: f32[8,1], index: 12, kind: input, shape index: {}]
  %s13 = inlined_call_operand.vmem [shape: f32[8,1], index: 13, kind: input, shape index: {}]
  %s14 = inlined_call_operand.vmem [shape: f32[8,72], index: 14, kind: input, shape index: {}]
  %s15 = inlined_call_operand.vmem [shape: f32[8,72], index: 15, kind: input, shape index: {}]
  %s16 = inlined_call_operand.vmem [shape: f32[8,1], index: 16, kind: input, shape index: {}]
  %s17 = inlined_call_operand.vmem [shape: f32[8,1], index: 17, kind: input, shape index: {}]
  %s18 = inlined_call_operand.vmem [shape: f32[8,16], index: 18, kind: input, shape index: {}]
  %s19 = inlined_call_operand.vmem [shape: f32[2,8,256], index: 19, kind: output, shape index: {}]
  %s20 = sld [smem:[#allocation0]]
  $region109: #{tree_forward.1} parent=0
    _
  %s22 = ssub.s32 1, %s20
  %s23 = scalar_select 0, %s22, %s20
  loop: start=0, step=1, limit=4
  $region2: #{tree_forward.1} parent=0 // loop_pre_header
    _
  $region3: #{tree_forward.1} parent=0 // loop_header
    %s25 = sphi 0, %s29
    %p26 = scmp.ge.s32.totalorder %s25, 4
    %s35 = sphi 0, %s37
    %s38 = sphi 0, %s35
    %s39 = sphi 0, %s38
    %s55 = sphi 0, %s39
    %s59 = sphi 0, %s59
    %s61 = sphi 0, %s59
    %s62 = sphi 0, %s61
    %s76 = sphi 0, %s62
    %s80 = sphi 0, %s80
    %s82 = sphi 0, %s80
    %s83 = sphi 0, %s82
    %s97 = sphi 0, %s83
    %s101 = sphi 0, %s101
    %s103 = sphi 0, %s101
    %s104 = sphi 0, %s103
    %s118 = sphi 0, %s104
    %s122 = sphi 0, %s122
    %s124 = sphi 0, %s122
    %s125 = sphi 0, %s124
    %s139 = sphi 0, %s125
    %s143 = sphi 0, %s143
    %s145 = sphi 0, %s143
    %s146 = sphi 0, %s145
    %s160 = sphi 0, %s146
    %s164 = sphi 0, %s164
    %s166 = sphi 0, %s164
    %s167 = sphi 0, %s166
    %s181 = sphi 0, %s167
    %s185 = sphi 0, %s185
    %s187 = sphi 0, %s185
    %s188 = sphi 0, %s187
    %s202 = sphi 0, %s188
    %s206 = sphi 0, %s206
    %s208 = sphi 0, %s206
    %s209 = sphi 0, %s208
    %s223 = sphi 0, %s209
    %s227 = sphi 0, %s227
    %s229 = sphi 0, %s227
    %s230 = sphi 0, %s229
    %s244 = sphi 0, %s230
    %s248 = sphi 0, %s248
    %s250 = sphi 0, %s248
    %s251 = sphi 0, %s250
    %s265 = sphi 0, %s251
    %s269 = sphi 0, %s269
    %s271 = sphi 0, %s269
    %s272 = sphi 0, %s271
    %s286 = sphi 0, %s272
    %s290 = sphi 0, %s290
    %s292 = sphi 0, %s290
    %s293 = sphi 0, %s292
    %s307 = sphi 0, %s293
    %s311 = sphi 0, %s311
    %s313 = sphi 0, %s311
    %s314 = sphi 0, %s313
    %s328 = sphi 0, %s314
    %s332 = sphi 0, %s332
    %s334 = sphi 0, %s332
    %s335 = sphi 0, %s334
    %s349 = sphi 0, %s335
    %s353 = sphi 0, %s353
    %s355 = sphi 0, %s353
    %s356 = sphi 0, %s355
    %s370 = sphi 0, %s356
    %s374 = sphi 0, %s374
    %s376 = sphi 0, %s374
    %s377 = sphi 0, %s376
    %s391 = sphi 0, %s377
    %s395 = sphi 0, %s395
    %s397 = sphi 0, %s395
    %s398 = sphi 0, %s397
    %s412 = sphi 0, %s398
    %s416 = sphi 0, %s416
    %s418 = sphi 0, %s416
    %s419 = sphi 0, %s418
    %s433 = sphi 0, %s419
    %s439 = sphi 0, %s441
    %s442 = sphi 0, %s439
    %s443 = sphi 0, %s442
    %s459 = sphi 0, %s443
  $region4: #{tree_forward.1} parent=0 // loop_header_branch
    %28 = sbr.rel (%p26) target = $region8
  $region5: #{tree_forward.1} parent=0 // loop_body
    %s30 = ssub.s32 %s25, 1
    %s31 = ssub.s32 %s25, 2
    %s32 = sadd.s32 %s25, 1
    %s33 = ssub.s32 %s25, %s32
    %p34 = scmp.eq.s32.totalorder %s33, 0
    %s36 = sadd.s32 %s35, 1
    %s37 = scalar_select %p34, %s35, %s36
    %p40 = pneg %p34
    %p41 = scmp.eq.s32.totalorder %s25, 1
    %p42 = por %p40, %p41
    %p43 = scmp.ne.s32.totalorder %s35, %s38
    %p44 = scmp.eq.s32.totalorder %s25, 0
    %p45 = por %p43, %p44
    %p46 = scmp.ne.s32.totalorder %s35, %s38
    %p47 = scmp.eq.s32.totalorder %s30, 1
    %p48 = por %p46, %p47
    %p49 = scmp.ne.s32.totalorder %s38, %s39
    %p50 = scmp.eq.s32.totalorder %s30, 0
    %p51 = por %p49, %p50
    %p52 = scmp.ne.s32.totalorder %s38, %s39
    %p53 = scmp.eq.s32.totalorder %s31, 1
    %p54 = por %p52, %p53
    %p56 = scmp.ne.s32.totalorder %s39, %s55
    %p57 = scmp.eq.s32.totalorder %s31, 0
    %p58 = por %p56, %p57
    %s60 = sadd.s32 %s59, 1
    %p63 = scmp.eq.s32.totalorder %s25, 1
    %p64 = scmp.ne.s32.totalorder %s59, %s61
    %p65 = scmp.eq.s32.totalorder %s25, 0
    %p66 = por %p64, %p65
    %p67 = scmp.ne.s32.totalorder %s59, %s61
    %p68 = scmp.eq.s32.totalorder %s30, 1
    %p69 = por %p67, %p68
    %p70 = scmp.ne.s32.totalorder %s61, %s62
    %p71 = scmp.eq.s32.totalorder %s30, 0
    %p72 = por %p70, %p71
    %p73 = scmp.ne.s32.totalorder %s61, %s62
    %p74 = scmp.eq.s32.totalorder %s31, 1
    %p75 = por %p73, %p74
    %p77 = scmp.ne.s32.totalorder %s62, %s76
    %p78 = scmp.eq.s32.totalorder %s31, 0
    %p79 = por %p77, %p78
    %s81 = sadd.s32 %s80, 1
    %p84 = scmp.eq.s32.totalorder %s25, 1
    %p85 = scmp.ne.s32.totalorder %s80, %s82
    %p86 = scmp.eq.s32.totalorder %s25, 0
    %p87 = por %p85, %p86
    %p88 = scmp.ne.s32.totalorder %s80, %s82
    %p89 = scmp.eq.s32.totalorder %s30, 1
    %p90 = por %p88, %p89
    %p91 = scmp.ne.s32.totalorder %s82, %s83
    %p92 = scmp.eq.s32.totalorder %s30, 0
    %p93 = por %p91, %p92
    %p94 = scmp.ne.s32.totalorder %s82, %s83
    %p95 = scmp.eq.s32.totalorder %s31, 1
    %p96 = por %p94, %p95
    %p98 = scmp.ne.s32.totalorder %s83, %s97
    %p99 = scmp.eq.s32.totalorder %s31, 0
    %p100 = por %p98, %p99
    %s102 = sadd.s32 %s101, 1
    %p105 = scmp.eq.s32.totalorder %s25, 1
    %p106 = scmp.ne.s32.totalorder %s101, %s103
    %p107 = scmp.eq.s32.totalorder %s25, 0
    %p108 = por %p106, %p107
    %p109 = scmp.ne.s32.totalorder %s101, %s103
    %p110 = scmp.eq.s32.totalorder %s30, 1
    %p111 = por %p109, %p110
    %p112 = scmp.ne.s32.totalorder %s103, %s104
    %p113 = scmp.eq.s32.totalorder %s30, 0
    %p114 = por %p112, %p113
    %p115 = scmp.ne.s32.totalorder %s103, %s104
    %p116 = scmp.eq.s32.totalorder %s31, 1
    %p117 = por %p115, %p116
    %p119 = scmp.ne.s32.totalorder %s104, %s118
    %p120 = scmp.eq.s32.totalorder %s31, 0
    %p121 = por %p119, %p120
    %s123 = sadd.s32 %s122, 1
    %p126 = scmp.eq.s32.totalorder %s25, 1
    %p127 = scmp.ne.s32.totalorder %s122, %s124
    %p128 = scmp.eq.s32.totalorder %s25, 0
    %p129 = por %p127, %p128
    %p130 = scmp.ne.s32.totalorder %s122, %s124
    %p131 = scmp.eq.s32.totalorder %s30, 1
    %p132 = por %p130, %p131
    %p133 = scmp.ne.s32.totalorder %s124, %s125
    %p134 = scmp.eq.s32.totalorder %s30, 0
    %p135 = por %p133, %p134
    %p136 = scmp.ne.s32.totalorder %s124, %s125
    %p137 = scmp.eq.s32.totalorder %s31, 1
    %p138 = por %p136, %p137
    %p140 = scmp.ne.s32.totalorder %s125, %s139
    %p141 = scmp.eq.s32.totalorder %s31, 0
    %p142 = por %p140, %p141
    %s144 = sadd.s32 %s143, 1
    %p147 = scmp.eq.s32.totalorder %s25, 1
    %p148 = scmp.ne.s32.totalorder %s143, %s145
    %p149 = scmp.eq.s32.totalorder %s25, 0
    %p150 = por %p148, %p149
    %p151 = scmp.ne.s32.totalorder %s143, %s145
    %p152 = scmp.eq.s32.totalorder %s30, 1
    %p153 = por %p151, %p152
    %p154 = scmp.ne.s32.totalorder %s145, %s146
    %p155 = scmp.eq.s32.totalorder %s30, 0
    %p156 = por %p154, %p155
    %p157 = scmp.ne.s32.totalorder %s145, %s146
    %p158 = scmp.eq.s32.totalorder %s31, 1
    %p159 = por %p157, %p158
    %p161 = scmp.ne.s32.totalorder %s146, %s160
    %p162 = scmp.eq.s32.totalorder %s31, 0
    %p163 = por %p161, %p162
    %s165 = sadd.s32 %s164, 1
    %p168 = scmp.eq.s32.totalorder %s25, 1
    %p169 = scmp.ne.s32.totalorder %s164, %s166
    %p170 = scmp.eq.s32.totalorder %s25, 0
    %p171 = por %p169, %p170
    %p172 = scmp.ne.s32.totalorder %s164, %s166
    %p173 = scmp.eq.s32.totalorder %s30, 1
    %p174 = por %p172, %p173
    %p175 = scmp.ne.s32.totalorder %s166, %s167
    %p176 = scmp.eq.s32.totalorder %s30, 0
    %p177 = por %p175, %p176
    %p178 = scmp.ne.s32.totalorder %s166, %s167
    %p179 = scmp.eq.s32.totalorder %s31, 1
    %p180 = por %p178, %p179
    %p182 = scmp.ne.s32.totalorder %s167, %s181
    %p183 = scmp.eq.s32.totalorder %s31, 0
    %p184 = por %p182, %p183
    %s186 = sadd.s32 %s185, 1
    %p189 = scmp.eq.s32.totalorder %s25, 1
    %p190 = scmp.ne.s32.totalorder %s185, %s187
    %p191 = scmp.eq.s32.totalorder %s25, 0
    %p192 = por %p190, %p191
    %p193 = scmp.ne.s32.totalorder %s185, %s187
    %p194 = scmp.eq.s32.totalorder %s30, 1
    %p195 = por %p193, %p194
    %p196 = scmp.ne.s32.totalorder %s187, %s188
    %p197 = scmp.eq.s32.totalorder %s30, 0
    %p198 = por %p196, %p197
    %p199 = scmp.ne.s32.totalorder %s187, %s188
    %p200 = scmp.eq.s32.totalorder %s31, 1
    %p201 = por %p199, %p200
    %p203 = scmp.ne.s32.totalorder %s188, %s202
    %p204 = scmp.eq.s32.totalorder %s31, 0
    %p205 = por %p203, %p204
    %s207 = sadd.s32 %s206, 1
    %p210 = scmp.eq.s32.totalorder %s25, 1
    %p211 = scmp.ne.s32.totalorder %s206, %s208
    %p212 = scmp.eq.s32.totalorder %s25, 0
    %p213 = por %p211, %p212
    %p214 = scmp.ne.s32.totalorder %s206, %s208
    %p215 = scmp.eq.s32.totalorder %s30, 1
    %p216 = por %p214, %p215
    %p217 = scmp.ne.s32.totalorder %s208, %s209
    %p218 = scmp.eq.s32.totalorder %s30, 0
    %p219 = por %p217, %p218
    %p220 = scmp.ne.s32.totalorder %s208, %s209
    %p221 = scmp.eq.s32.totalorder %s31, 1
    %p222 = por %p220, %p221
    %p224 = scmp.ne.s32.totalorder %s209, %s223
    %p225 = scmp.eq.s32.totalorder %s31, 0
    %p226 = por %p224, %p225
    %s228 = sadd.s32 %s227, 1
    %p231 = scmp.eq.s32.totalorder %s25, 1
    %p232 = scmp.ne.s32.totalorder %s227, %s229
    %p233 = scmp.eq.s32.totalorder %s25, 0
    %p234 = por %p232, %p233
    %p235 = scmp.ne.s32.totalorder %s227, %s229
    %p236 = scmp.eq.s32.totalorder %s30, 1
    %p237 = por %p235, %p236
    %p238 = scmp.ne.s32.totalorder %s229, %s230
    %p239 = scmp.eq.s32.totalorder %s30, 0
    %p240 = por %p238, %p239
    %p241 = scmp.ne.s32.totalorder %s229, %s230
    %p242 = scmp.eq.s32.totalorder %s31, 1
    %p243 = por %p241, %p242
    %p245 = scmp.ne.s32.totalorder %s230, %s244
    %p246 = scmp.eq.s32.totalorder %s31, 0
    %p247 = por %p245, %p246
    %s249 = sadd.s32 %s248, 1
    %p252 = scmp.eq.s32.totalorder %s25, 1
    %p253 = scmp.ne.s32.totalorder %s248, %s250
    %p254 = scmp.eq.s32.totalorder %s25, 0
    %p255 = por %p253, %p254
    %p256 = scmp.ne.s32.totalorder %s248, %s250
    %p257 = scmp.eq.s32.totalorder %s30, 1
    %p258 = por %p256, %p257
    %p259 = scmp.ne.s32.totalorder %s250, %s251
    %p260 = scmp.eq.s32.totalorder %s30, 0
    %p261 = por %p259, %p260
    %p262 = scmp.ne.s32.totalorder %s250, %s251
    %p263 = scmp.eq.s32.totalorder %s31, 1
    %p264 = por %p262, %p263
    %p266 = scmp.ne.s32.totalorder %s251, %s265
    %p267 = scmp.eq.s32.totalorder %s31, 0
    %p268 = por %p266, %p267
    %s270 = sadd.s32 %s269, 1
    %p273 = scmp.eq.s32.totalorder %s25, 1
    %p274 = scmp.ne.s32.totalorder %s269, %s271
    %p275 = scmp.eq.s32.totalorder %s25, 0
    %p276 = por %p274, %p275
    %p277 = scmp.ne.s32.totalorder %s269, %s271
    %p278 = scmp.eq.s32.totalorder %s30, 1
    %p279 = por %p277, %p278
    %p280 = scmp.ne.s32.totalorder %s271, %s272
    %p281 = scmp.eq.s32.totalorder %s30, 0
    %p282 = por %p280, %p281
    %p283 = scmp.ne.s32.totalorder %s271, %s272
    %p284 = scmp.eq.s32.totalorder %s31, 1
    %p285 = por %p283, %p284
    %p287 = scmp.ne.s32.totalorder %s272, %s286
    %p288 = scmp.eq.s32.totalorder %s31, 0
    %p289 = por %p287, %p288
    %s291 = sadd.s32 %s290, 1
    %p294 = scmp.eq.s32.totalorder %s25, 1
    %p295 = scmp.ne.s32.totalorder %s290, %s292
    %p296 = scmp.eq.s32.totalorder %s25, 0
    %p297 = por %p295, %p296
    %p298 = scmp.ne.s32.totalorder %s290, %s292
    %p299 = scmp.eq.s32.totalorder %s30, 1
    %p300 = por %p298, %p299
    %p301 = scmp.ne.s32.totalorder %s292, %s293
    %p302 = scmp.eq.s32.totalorder %s30, 0
    %p303 = por %p301, %p302
    %p304 = scmp.ne.s32.totalorder %s292, %s293
    %p305 = scmp.eq.s32.totalorder %s31, 1
    %p306 = por %p304, %p305
    %p308 = scmp.ne.s32.totalorder %s293, %s307
    %p309 = scmp.eq.s32.totalorder %s31, 0
    %p310 = por %p308, %p309
    %s312 = sadd.s32 %s311, 1
    %p315 = scmp.eq.s32.totalorder %s25, 1
    %p316 = scmp.ne.s32.totalorder %s311, %s313
    %p317 = scmp.eq.s32.totalorder %s25, 0
    %p318 = por %p316, %p317
    %p319 = scmp.ne.s32.totalorder %s311, %s313
    %p320 = scmp.eq.s32.totalorder %s30, 1
    %p321 = por %p319, %p320
    %p322 = scmp.ne.s32.totalorder %s313, %s314
    %p323 = scmp.eq.s32.totalorder %s30, 0
    %p324 = por %p322, %p323
    %p325 = scmp.ne.s32.totalorder %s313, %s314
    %p326 = scmp.eq.s32.totalorder %s31, 1
    %p327 = por %p325, %p326
    %p329 = scmp.ne.s32.totalorder %s314, %s328
    %p330 = scmp.eq.s32.totalorder %s31, 0
    %p331 = por %p329, %p330
    %s333 = sadd.s32 %s332, 1
    %p336 = scmp.eq.s32.totalorder %s25, 1
    %p337 = scmp.ne.s32.totalorder %s332, %s334
    %p338 = scmp.eq.s32.totalorder %s25, 0
    %p339 = por %p337, %p338
    %p340 = scmp.ne.s32.totalorder %s332, %s334
    %p341 = scmp.eq.s32.totalorder %s30, 1
    %p342 = por %p340, %p341
    %p343 = scmp.ne.s32.totalorder %s334, %s335
    %p344 = scmp.eq.s32.totalorder %s30, 0
    %p345 = por %p343, %p344
    %p346 = scmp.ne.s32.totalorder %s334, %s335
    %p347 = scmp.eq.s32.totalorder %s31, 1
    %p348 = por %p346, %p347
    %p350 = scmp.ne.s32.totalorder %s335, %s349
    %p351 = scmp.eq.s32.totalorder %s31, 0
    %p352 = por %p350, %p351
    %s354 = sadd.s32 %s353, 1
    %p357 = scmp.eq.s32.totalorder %s25, 1
    %p358 = scmp.ne.s32.totalorder %s353, %s355
    %p359 = scmp.eq.s32.totalorder %s25, 0
    %p360 = por %p358, %p359
    %p361 = scmp.ne.s32.totalorder %s353, %s355
    %p362 = scmp.eq.s32.totalorder %s30, 1
    %p363 = por %p361, %p362
    %p364 = scmp.ne.s32.totalorder %s355, %s356
    %p365 = scmp.eq.s32.totalorder %s30, 0
    %p366 = por %p364, %p365
    %p367 = scmp.ne.s32.totalorder %s355, %s356
    %p368 = scmp.eq.s32.totalorder %s31, 1
    %p369 = por %p367, %p368
    %p371 = scmp.ne.s32.totalorder %s356, %s370
    %p372 = scmp.eq.s32.totalorder %s31, 0
    %p373 = por %p371, %p372
    %s375 = sadd.s32 %s374, 1
    %p378 = scmp.eq.s32.totalorder %s25, 1
    %p379 = scmp.ne.s32.totalorder %s374, %s376
    %p380 = scmp.eq.s32.totalorder %s25, 0
    %p381 = por %p379, %p380
    %p382 = scmp.ne.s32.totalorder %s374, %s376
    %p383 = scmp.eq.s32.totalorder %s30, 1
    %p384 = por %p382, %p383
    %p385 = scmp.ne.s32.totalorder %s376, %s377
    %p386 = scmp.eq.s32.totalorder %s30, 0
    %p387 = por %p385, %p386
    %p388 = scmp.ne.s32.totalorder %s376, %s377
    %p389 = scmp.eq.s32.totalorder %s31, 1
    %p390 = por %p388, %p389
    %p392 = scmp.ne.s32.totalorder %s377, %s391
    %p393 = scmp.eq.s32.totalorder %s31, 0
    %p394 = por %p392, %p393
    %s396 = sadd.s32 %s395, 1
    %p399 = scmp.eq.s32.totalorder %s25, 1
    %p400 = scmp.ne.s32.totalorder %s395, %s397
    %p401 = scmp.eq.s32.totalorder %s25, 0
    %p402 = por %p400, %p401
    %p403 = scmp.ne.s32.totalorder %s395, %s397
    %p404 = scmp.eq.s32.totalorder %s30, 1
    %p405 = por %p403, %p404
    %p406 = scmp.ne.s32.totalorder %s397, %s398
    %p407 = scmp.eq.s32.totalorder %s30, 0
    %p408 = por %p406, %p407
    %p409 = scmp.ne.s32.totalorder %s397, %s398
    %p410 = scmp.eq.s32.totalorder %s31, 1
    %p411 = por %p409, %p410
    %p413 = scmp.ne.s32.totalorder %s398, %s412
    %p414 = scmp.eq.s32.totalorder %s31, 0
    %p415 = por %p413, %p414
    %s417 = sadd.s32 %s416, 1
    %p420 = scmp.eq.s32.totalorder %s25, 1
    %p421 = scmp.ne.s32.totalorder %s416, %s418
    %p422 = scmp.eq.s32.totalorder %s25, 0
    %p423 = por %p421, %p422
    %p424 = scmp.ne.s32.totalorder %s416, %s418
    %p425 = scmp.eq.s32.totalorder %s30, 1
    %p426 = por %p424, %p425
    %p427 = scmp.ne.s32.totalorder %s418, %s419
    %p428 = scmp.eq.s32.totalorder %s30, 0
    %p429 = por %p427, %p428
    %p430 = scmp.ne.s32.totalorder %s418, %s419
    %p431 = scmp.eq.s32.totalorder %s31, 1
    %p432 = por %p430, %p431
    %p434 = scmp.ne.s32.totalorder %s419, %s433
    %p435 = scmp.eq.s32.totalorder %s31, 0
    %p436 = por %p434, %p435
    %s437 = ssub.s32 %s25, %s32
    %p438 = scmp.eq.s32.totalorder %s437, 0
    %s440 = sadd.s32 %s439, 1
    %s441 = scalar_select %p438, %s439, %s440
    %p444 = pneg %p438
    %p445 = scmp.eq.s32.totalorder %s25, 1
    %p446 = por %p444, %p445
    %p447 = scmp.ne.s32.totalorder %s439, %s442
    %p448 = scmp.eq.s32.totalorder %s25, 0
    %p449 = por %p447, %p448
    %p450 = scmp.ne.s32.totalorder %s439, %s442
    %p451 = scmp.eq.s32.totalorder %s30, 1
    %p452 = por %p450, %p451
    %p453 = scmp.ne.s32.totalorder %s442, %s443
    %p454 = scmp.eq.s32.totalorder %s30, 0
    %p455 = por %p453, %p454
    %p456 = scmp.ne.s32.totalorder %s442, %s443
    %p457 = scmp.eq.s32.totalorder %s31, 1
    %p458 = por %p456, %p457
    %p460 = scmp.ne.s32.totalorder %s443, %s459
    %p461 = scmp.eq.s32.totalorder %s31, 0
    %p462 = por %p460, %p461
    %p463 = scmp.le.s32.totalorder 1, %s25
    %p464 = scmp.lt.s32.totalorder %s25, 3
    %p465 = pnand %p463, %p464
    %p466 = pneg %p465
    // Predicated region
    $region9: #{tree_forward.1} parent=5 // pred_check
      _
    $region10: #{tree_forward.1} parent=5 // pred_check_branch
      %468 = sbr.rel (%p465) target = $region12
    $region11: #{tree_forward.1} parent=5 // pred_region
      %s469 = ssub.s32 %s25, 1
      // Predicated region
      $region13: #{tree_forward.1} parent=11 // pred_check
        %p470 = pneg %p72
      $region14: #{tree_forward.1} parent=11 // pred_check_branch
        %472 = sbr.rel (%p470) target = $region16
      $region15: #{tree_forward.1} parent=11 // pred_region
        _
      $region16: #{tree_forward.1} parent=11 // pred_fallthru
        _
      // Predicated region
      $region17: #{tree_forward.1} parent=11 // pred_check
        %p473 = pneg %p93
      $region18: #{tree_forward.1} parent=11 // pred_check_branch
        %475 = sbr.rel (%p473) target = $region20
      $region19: #{tree_forward.1} parent=11 // pred_region
        _
      $region20: #{tree_forward.1} parent=11 // pred_fallthru
        _
      // Predicated region
      $region21: #{tree_forward.1} parent=11 // pred_check
        %p476 = pneg %p114
      $region22: #{tree_forward.1} parent=11 // pred_check_branch
        %478 = sbr.rel (%p476) target = $region24
      $region23: #{tree_forward.1} parent=11 // pred_region
        _
      $region24: #{tree_forward.1} parent=11 // pred_fallthru
        _
      // Predicated region
      $region25: #{tree_forward.1} parent=11 // pred_check
        %p479 = pneg %p135
      $region26: #{tree_forward.1} parent=11 // pred_check_branch
        %481 = sbr.rel (%p479) target = $region28
      $region27: #{tree_forward.1} parent=11 // pred_region
        _
      $region28: #{tree_forward.1} parent=11 // pred_fallthru
        _
      // Predicated region
      $region29: #{tree_forward.1} parent=11 // pred_check
        %p482 = pneg %p156
      $region30: #{tree_forward.1} parent=11 // pred_check_branch
        %484 = sbr.rel (%p482) target = $region32
      $region31: #{tree_forward.1} parent=11 // pred_region
        _
      $region32: #{tree_forward.1} parent=11 // pred_fallthru
        _
      // Predicated region
      $region33: #{tree_forward.1} parent=11 // pred_check
        %p485 = pneg %p177
      $region34: #{tree_forward.1} parent=11 // pred_check_branch
        %487 = sbr.rel (%p485) target = $region36
      $region35: #{tree_forward.1} parent=11 // pred_region
        _
      $region36: #{tree_forward.1} parent=11 // pred_fallthru
        _
      // Predicated region
      $region37: #{tree_forward.1} parent=11 // pred_check
        %p488 = pneg %p198
      $region38: #{tree_forward.1} parent=11 // pred_check_branch
        %490 = sbr.rel (%p488) target = $region40
      $region39: #{tree_forward.1} parent=11 // pred_region
        _
      $region40: #{tree_forward.1} parent=11 // pred_fallthru
        _
      // Predicated region
      $region41: #{tree_forward.1} parent=11 // pred_check
        %p491 = pneg %p219
      $region42: #{tree_forward.1} parent=11 // pred_check_branch
        %493 = sbr.rel (%p491) target = $region44
      $region43: #{tree_forward.1} parent=11 // pred_region
        _
      $region44: #{tree_forward.1} parent=11 // pred_fallthru
        _
      // Predicated region
      $region45: #{tree_forward.1} parent=11 // pred_check
        %p494 = pneg %p240
      $region46: #{tree_forward.1} parent=11 // pred_check_branch
        %496 = sbr.rel (%p494) target = $region48
      $region47: #{tree_forward.1} parent=11 // pred_region
        _
      $region48: #{tree_forward.1} parent=11 // pred_fallthru
        _
      // Predicated region
      $region49: #{tree_forward.1} parent=11 // pred_check
        %p497 = pneg %p261
      $region50: #{tree_forward.1} parent=11 // pred_check_branch
        %499 = sbr.rel (%p497) target = $region52
      $region51: #{tree_forward.1} parent=11 // pred_region
        _
      $region52: #{tree_forward.1} parent=11 // pred_fallthru
        _
      // Predicated region
      $region53: #{tree_forward.1} parent=11 // pred_check
        %p500 = pneg %p282
      $region54: #{tree_forward.1} parent=11 // pred_check_branch
        %502 = sbr.rel (%p500) target = $region56
      $region55: #{tree_forward.1} parent=11 // pred_region
        _
      $region56: #{tree_forward.1} parent=11 // pred_fallthru
        _
      // Predicated region
      $region57: #{tree_forward.1} parent=11 // pred_check
        %p503 = pneg %p303
      $region58: #{tree_forward.1} parent=11 // pred_check_branch
        %505 = sbr.rel (%p503) target = $region60
      $region59: #{tree_forward.1} parent=11 // pred_region
        _
      $region60: #{tree_forward.1} parent=11 // pred_fallthru
        _
      // Predicated region
      $region61: #{tree_forward.1} parent=11 // pred_check
        %p506 = pneg %p324
      $region62: #{tree_forward.1} parent=11 // pred_check_branch
        %508 = sbr.rel (%p506) target = $region64
      $region63: #{tree_forward.1} parent=11 // pred_region
        _
      $region64: #{tree_forward.1} parent=11 // pred_fallthru
        _
      // Predicated region
      $region65: #{tree_forward.1} parent=11 // pred_check
        %p509 = pneg %p345
      $region66: #{tree_forward.1} parent=11 // pred_check_branch
        %511 = sbr.rel (%p509) target = $region68
      $region67: #{tree_forward.1} parent=11 // pred_region
        _
      $region68: #{tree_forward.1} parent=11 // pred_fallthru
        _
      // Predicated region
      $region69: #{tree_forward.1} parent=11 // pred_check
        %p512 = pneg %p366
      $region70: #{tree_forward.1} parent=11 // pred_check_branch
        %514 = sbr.rel (%p512) target = $region72
      $region71: #{tree_forward.1} parent=11 // pred_region
        _
      $region72: #{tree_forward.1} parent=11 // pred_fallthru
        _
      // Predicated region
      $region73: #{tree_forward.1} parent=11 // pred_check
        %p515 = pneg %p387
      $region74: #{tree_forward.1} parent=11 // pred_check_branch
        %517 = sbr.rel (%p515) target = $region76
      $region75: #{tree_forward.1} parent=11 // pred_region
        _
      $region76: #{tree_forward.1} parent=11 // pred_fallthru
        _
      // Predicated region
      $region77: #{tree_forward.1} parent=11 // pred_check
        %p518 = pneg %p408
      $region78: #{tree_forward.1} parent=11 // pred_check_branch
        %520 = sbr.rel (%p518) target = $region80
      $region79: #{tree_forward.1} parent=11 // pred_region
        _
      $region80: #{tree_forward.1} parent=11 // pred_fallthru
        _
      // Predicated region
      $region81: #{tree_forward.1} parent=11 // pred_check
        %p521 = pneg %p429
      $region82: #{tree_forward.1} parent=11 // pred_check_branch
        %523 = sbr.rel (%p521) target = $region84
      $region83: #{tree_forward.1} parent=11 // pred_region
        _
      $region84: #{tree_forward.1} parent=11 // pred_fallthru
        _
    $region12: #{tree_forward.1} parent=5 // pred_fallthru
      _
    %p524 = scmp.lt.s32.totalorder %s25, 2
    // Predicated region
    $region85: #{tree_forward.1} parent=5 // pred_check
      %p525 = pneg %p524
    $region86: #{tree_forward.1} parent=5 // pred_check_branch
      %527 = sbr.rel (%p525) target = $region88
    $region87: #{tree_forward.1} parent=5 // pred_region
      // Predicated region
      $region89: #{tree_forward.1} parent=87 // pred_check
        %p528 = pneg %p45
      $region90: #{tree_forward.1} parent=87 // pred_check_branch
        %530 = sbr.rel (%p528) target = $region92
      $region91: #{tree_forward.1} parent=87 // pred_region
        %p531 = scmp.lt.s32.totalorder %s25, 1
        %s532 = scalar_select %p531, %s25, 1
        %s533 = smul.addr %s532, 2
        %s534 = smul.addr %s533, 8
        %s535 = scalar_lea.vmem %s0, %s534
      $region92: #{tree_forward.1} parent=87 // pred_fallthru
        _
    $region88: #{tree_forward.1} parent=5 // pred_fallthru
      _
    %p536 = scmp.le.s32.totalorder 1, %s25
    %p537 = scmp.lt.s32.totalorder %s25, 3
    %p538 = pnand %p536, %p537
    %p539 = pneg %p538
    // Predicated region
    $region93: #{tree_forward.1} parent=5 // pred_check
      _
    $region94: #{tree_forward.1} parent=5 // pred_check_branch
      %541 = sbr.rel (%p538) target = $region96
    $region95: #{tree_forward.1} parent=5 // pred_region
      %s542 = ssub.s32 %s25, 1
      %p543 = scmp.lt.s32.totalorder %s30, 1
      %s544 = scalar_select %p543, %s30, 1
      %s545 = smul.addr %s544, 2
      %s546 = smul.addr %s545, 8
      %s547 = scalar_lea.vmem %s0, %s546
      %p548 = pneg %p51
      %p549 = pneg %p48
      %p550 = pneg %p72
      %p551 = pneg %p69
      %p552 = pneg %p93
      %p553 = pneg %p90
      %p554 = pneg %p114
      %p555 = pneg %p111
      %p556 = pneg %p135
      %p557 = pneg %p132
      %p558 = pneg %p156
      %p559 = pneg %p153
      %p560 = pneg %p177
      %p561 = pneg %p174
      %p562 = pneg %p198
      %p563 = pneg %p195
      %p564 = pneg %p219
      %p565 = pneg %p216
      %p566 = pneg %p240
      %p567 = pneg %p237
      %p568 = pneg %p261
      %p569 = pneg %p258
      %p570 = pneg %p282
      %p571 = pneg %p279
      %p572 = pneg %p303
      %p573 = pneg %p300
      %p574 = pneg %p324
      %p575 = pneg %p321
      %p576 = pneg %p345
      %p577 = pneg %p342
      %p578 = pneg %p366
      %p579 = pneg %p363
      %p580 = pneg %p387
      %p581 = pneg %p384
      %p582 = pneg %p408
      %p583 = pneg %p405
      %p584 = pneg %p429
      %p585 = pneg %p426
      %p586 = pneg %p455
      %p587 = pneg %p452
      %p588 = scmp.lt.s32.totalorder %s30, 1
      %s589 = scalar_select %p588, %s30, 1
      %s590 = smul.addr %s589, 2
      %s591 = smul.addr %s590, 8
      %s592 = scalar_lea.vmem %s19, %s591
      %p593 = scmp.lt.s32.totalorder %s30, 1
      %s594 = scalar_select %p593, %s30, 1
      %s595 = smul.addr %s594, 2
      %s596 = smul.addr %s595, 8
      %s597 = scalar_lea.vmem %s0, %s596
      %p598 = scmp.lt.s32.totalorder %s30, 1
      %s599 = scalar_select %p598, %s30, 1
      %s600 = smul.addr %s599, 2
      %s601 = smul.addr %s600, 8
      %s602 = scalar_lea.vmem %s19, %s601
      %v603 = vlaneseq
      %v604 = vand.u32 %v603, 127
      %v605 = vadd.s32 %v604, 128
      %vm606 = vcmp.lt.s32.totalorder %v604, 0
      %v607 = vsub.s32 0, %v604
      %v608 = vsel %vm606, %v607, %v604
      %v609 = vshrl.u32 %v608, 4
      %v610 = vand.u32 %v608, 15
      %v611 = vsub.s32 0, %v610
      %v612 = vsel %vm606, %v611, %v610
      %vm613 = vcmp.lt.s32.totalorder %v605, 0
      %v614 = vsub.s32 0, %v605
      %v615 = vsel %vm613, %v614, %v605
      %v616 = vshrl.u32 %v615, 4
      %v617 = vand.u32 %v615, 15
      %v618 = vsub.s32 0, %v617
      %v619 = vsel %vm613, %v618, %v617
      %vm620 = vcmp.ne.s32.totalorder %v612, 0
      %vm621 = vcmp.ne.s32.totalorder %v619, 0
      %vm622 = vcmp.lt.s32.totalorder %v612, 0
      %vm623 = vcmp.lt.s32.totalorder %v619, 0
      %vm624 = vmand %vm622, %vm620
      %vm625 = vmand %vm623, %vm621
      %v626 = vadd.s32 %v612, 16
      %v627 = vadd.s32 %v619, 16
      %v628 = vsel %vm624, %v626, %v612
      %v629 = vsel %vm625, %v627, %v619
      %vm630 = vcmp.ge.s32.totalorder %v628, 1
      %vm631 = vcmp.ge.s32.totalorder %v629, 1
      %vm632 = vcmp.lt.s32.totalorder %v628, 15
      %vm633 = vcmp.lt.s32.totalorder %v629, 15
      %v634 = vld [vmem:[%s597] sm:$0xff]
      %v635 = vld [vmem:[%s597 + $0x8] sm:$0xff]
      %v636 = vsel %vm630, 1, 0
      %v637 = vsel %vm631, 1, 0
      %vm638 = vcmp.eq.s32.totalorder %v636, 1
      %vm639 = vcmp.eq.s32.totalorder %v637, 1
      %643 = vrot.lane.b32.xlu0 0.0, 17
      %v644 = vpop.permute.xlu0 %643
      %645 = vrot.lane.b32.xlu0 %v634, 17
      %v646 = vpop.permute.xlu0 %645
      %647 = vrot.lane.b32.xlu0 %v635, 17
      %v648 = vpop.permute.xlu0 %647
      %vm649 = vcmask 138240
      %v650 = vsel %vm649, %v644, %v646
      %v651 = vsel %vm649, %v646, %v648
      %v654 = vsel %vm638, %v650, 0.0
      %v655 = vsel %vm639, %v651, 0.0
      %v656 = vsel %vm632, 1, 0
      %v657 = vsel %vm633, 1, 0
      %vm658 = vcmp.eq.s32.totalorder %v656, 1
      %vm659 = vcmp.eq.s32.totalorder %v657, 1
      %660 = vrot.lane.b32.xlu0 0.0, 15
      %v661 = vpop.permute.xlu0 %660
      %662 = vrot.lane.b32.xlu0 %v634, 15
      %v663 = vpop.permute.xlu0 %662
      %664 = vrot.lane.b32.xlu0 %v635, 15
      %v665 = vpop.permute.xlu0 %664
      %vm666 = vcmask 121856
      %v667 = vsel %vm666, %v661, %v663
      %v668 = vsel %vm666, %v663, %v665
      %v671 = vsel %vm658, %v667, 0.0
      %v672 = vsel %vm659, %v668, 0.0
      %673 = vrot.lane.b32.xlu0 0.0, 1
      %v674 = vpop.permute.xlu0 %673
      %675 = vrot.lane.b32.xlu0 %v634, 1
      %v676 = vpop.permute.xlu0 %675
      %677 = vrot.lane.b32.xlu0 %v635, 1
      %v678 = vpop.permute.xlu0 %677
      %vm679 = vcmask 7168
      %v680 = vsel %vm679, %v674, %v676
      %v681 = vsel %vm679, %v676, %v678
      %v684 = vsel %vm638, %v680, 0.0
      %v685 = vsel %vm639, %v681, 0.0
      %686 = vrot.lane.b32.xlu0 %v634, 127
      %v687 = vpop.permute.xlu0 %686
      %688 = vrot.lane.b32.xlu0 %v635, 127
      %v689 = vpop.permute.xlu0 %688
      %690 = vrot.lane.b32.xlu0 0.0, 127
      %v691 = vpop.permute.xlu0 %690
      %vm692 = vcmask 1039360
      %v693 = vsel %vm692, %v687, %v689
      %v694 = vsel %vm692, %v689, %v691
      %v697 = vsel %vm658, %v693, 0.0
      %v698 = vsel %vm659, %v694, 0.0
      %699 = vrot.lane.b32.xlu0 %v634, 113
      %v700 = vpop.permute.xlu0 %699
      %701 = vrot.lane.b32.xlu0 %v635, 113
      %v702 = vpop.permute.xlu0 %701
      %703 = vrot.lane.b32.xlu0 0.0, 113
      %v704 = vpop.permute.xlu0 %703
      %vm705 = vcmask 924672
      %v706 = vsel %vm705, %v700, %v702
      %v707 = vsel %vm705, %v702, %v704
      %v710 = vsel %vm638, %v706, 0.0
      %v711 = vsel %vm639, %v707, 0.0
      %712 = vrot.lane.b32.xlu0 %v634, 111
      %v713 = vpop.permute.xlu0 %712
      %714 = vrot.lane.b32.xlu0 %v635, 111
      %v715 = vpop.permute.xlu0 %714
      %716 = vrot.lane.b32.xlu0 0.0, 111
      %v717 = vpop.permute.xlu0 %716
      %vm718 = vcmask 908288
      %v719 = vsel %vm718, %v713, %v715
      %v720 = vsel %vm718, %v715, %v717
      %v723 = vsel %vm658, %v719, 0.0
      %v724 = vsel %vm659, %v720, 0.0
      %725 = vrot.lane.b32.xlu0 0.0, 16
      %v726 = vpop.permute.xlu0 %725
      %727 = vrot.lane.b32.xlu0 %v634, 16
      %v728 = vpop.permute.xlu0 %727
      %729 = vrot.lane.b32.xlu0 %v635, 16
      %v730 = vpop.permute.xlu0 %729
      %vm731 = vcmask 130048
      %v732 = vsel %vm731, %v726, %v728
      %v733 = vsel %vm731, %v728, %v730
      %736 = vrot.lane.b32.xlu0 %v634, 112
      %v737 = vpop.permute.xlu0 %736
      %738 = vrot.lane.b32.xlu0 %v635, 112
      %v739 = vpop.permute.xlu0 %738
      %740 = vrot.lane.b32.xlu0 0.0, 112
      %v741 = vpop.permute.xlu0 %740
      %vm742 = vcmask 916480
      %v743 = vsel %vm742, %v737, %v739
      %v744 = vsel %vm742, %v739, %v741
      %v747 = vld [vmem:[%s5] sm:$0xff]
      %vm748 = vcmask 588800
      %v750 = vsel %vm748, %v747, 0
      %752 = vmatprep.subr.mxu0 %v655
      %753 = vmatpush1.msra.mxu0 %v654
      %754 = vmatprep.subr.mxu0 %v733
      %755 = vmatpush1.msra.mxu0 %v732
      %756 = vmatprep.subr.mxu0 %v672
      %757 = vmatpush1.msra.mxu0 %v671
      %758 = vmatprep.subr.mxu0 %v685
      %759 = vmatpush1.msra.mxu0 %v684
      %760 = vmatprep.subr.mxu0 %v635
      %761 = vmatpush1.msra.mxu0 %v634
      %762 = vmatprep.subr.mxu0 %v698
      %763 = vmatpush1.msra.mxu0 %v697
      %764 = vmatprep.subr.mxu0 %v711
      %765 = vmatpush1.msra.mxu0 %v710
      %766 = vmatprep.subr.mxu0 %v744
      %767 = vmatpush1.msra.mxu0 %v743
      %768 = vmatprep.subr.mxu0 %v724
      %769 = vmatpush1.msra.mxu0 %v723
      %770 = vmatprep.subr.mxu0 0.0
      %771 = vmatpush1.msra.mxu0 0.0
      %772 = vmatprep.subr.mxu0 0.0
      %773 = vmatpush1.msra.mxu0 0.0
      %774 = vmatprep.subr.mxu0 0.0
      %775 = vmatpush1.msra.mxu0 0.0
      %776 = vmatprep.subr.mxu0 0.0
      %777 = vmatpush1.msra.mxu0 0.0
      %778 = vmatprep.subr.mxu0 0.0
      %779 = vmatpush1.msra.mxu0 0.0
      %780 = vmatprep.subr.mxu0 0.0
      %781 = vmatpush1.msra.mxu0 0.0
      %782 = vmatprep.subr.mxu0 0.0
      %783 = vmatpush1.msra.mxu0 0.0
      %784 = vmatprep.subr.mxu0 0.0
      %785 = vmatpush1.msra.mxu0 0.0
      %786 = vmatprep.subr.mxu0 0.0
      %787 = vmatpush1.msra.mxu0 0.0
      %788 = vmatprep.subr.mxu0 0.0
      %789 = vmatpush1.msra.mxu0 0.0
      %790 = vmatprep.subr.mxu0 0.0
      %791 = vmatpush1.msra.mxu0 0.0
      %792 = vmatprep.subr.mxu0 0.0
      %793 = vmatpush1.msra.mxu0 0.0
      %794 = vmatprep.subr.mxu0 0.0
      %795 = vmatpush1.msra.mxu0 0.0
      %796 = vmatprep.subr.mxu0 0.0
      %797 = vmatpush1.msra.mxu0 0.0
      %798 = vmatprep.subr.mxu0 0.0
      %799 = vmatpush1.msra.mxu0 0.0
      %800 = vmatprep.subr.mxu0 0.0
      %801 = vmatpush1.msra.mxu0 0.0
      %802 = vmatprep.subr.mxu0 0.0
      %803 = vmatpush1.msra.mxu0 0.0
      %804 = vmatprep.subr.mxu0 0.0
      %805 = vmatpush1.msra.mxu0 0.0
      %806 = vmatprep.subr.mxu0 0.0
      %807 = vmatpush1.msra.mxu0 0.0
      %808 = vmatprep.subr.mxu0 0.0
      %809 = vmatpush1.msra.mxu0 0.0
      %810 = vmatprep.subr.mxu0 0.0
      %811 = vmatpush1.msra.mxu0 0.0
      %812 = vmatprep.subr.mxu0 0.0
      %813 = vmatpush1.msra.mxu0 0.0
      %814 = vmatprep.subr.mxu0 0.0
      %815 = vmatpush1.msra.mxu0 0.0
      %816 = vmatprep.mubr.f32.mxu0 0.0
      %817 = vmatmul.mubr.f32.gmra.mrb[0].mxu0 %v750
      %v818 = vpop.f32.mrb[0].mxu0
      %v819 = vadd.f32 0.0, %v818
      %v820 = vpop.f32.mrb[0].mxu0
      %v821 = vadd.f32 0.0, %v820
      %822 = vdwg.mxu0
      %v823 = vld [vmem:[%s2] sm:$0xff]
      %825 = vset.pattern.permute.xlu0 0
      %826 = vperm.xlu0 %825, %v823
      %v827 = vpop.permute.xlu0 %826
      %v829 = vmul.f32 %v819, %v827
      %v830 = vmul.f32 %v821, %v827
      %v831 = vld [vmem:[%s1] sm:$0xff]
      %833 = vset.pattern.permute.xlu0 0
      %834 = vperm.xlu0 %833, %v831
      %v835 = vpop.permute.xlu0 %834
      %v837 = vadd.f32 %v829, %v835
      %v838 = vadd.f32 %v830, %v835
      %v839 = vmax.f32 %v837, 0.0
      %v840 = vmax.f32 %v838, 0.0
      %v841 = vld [vmem:[%s9] sm:$0xff]
      %vm842 = vcmask 64512
      %v844 = vsel %vm842, %v841, 0
      %846 = vmatprep.subr.mxu0 %v635
      %847 = vmatpush1.msra.mxu0 %v634
      %848 = vmatprep.subr.mxu0 0.0
      %849 = vmatpush1.msra.mxu0 0.0
      %850 = vmatprep.subr.mxu0 0.0
      %851 = vmatpush1.msra.mxu0 0.0
      %852 = vmatprep.subr.mxu0 0.0
      %853 = vmatpush1.msra.mxu0 0.0
      %854 = vmatprep.subr.mxu0 0.0
      %855 = vmatpush1.msra.mxu0 0.0
      %856 = vmatprep.subr.mxu0 0.0
      %857 = vmatpush1.msra.mxu0 0.0
      %858 = vmatprep.subr.mxu0 0.0
      %859 = vmatpush1.msra.mxu0 0.0
      %860 = vmatprep.subr.mxu0 0.0
      %861 = vmatpush1.msra.mxu0 0.0
      %862 = vmatprep.subr.mxu0 0.0
      %863 = vmatpush1.msra.mxu0 0.0
      %864 = vmatprep.subr.mxu0 0.0
      %865 = vmatpush1.msra.mxu0 0.0
      %866 = vmatprep.subr.mxu0 0.0
      %867 = vmatpush1.msra.mxu0 0.0
      %868 = vmatprep.subr.mxu0 0.0
      %869 = vmatpush1.msra.mxu0 0.0
      %870 = vmatprep.subr.mxu0 0.0
      %871 = vmatpush1.msra.mxu0 0.0
      %872 = vmatprep.subr.mxu0 0.0
      %873 = vmatpush1.msra.mxu0 0.0
      %874 = vmatprep.subr.mxu0 0.0
      %875 = vmatpush1.msra.mxu0 0.0
      %876 = vmatprep.subr.mxu0 0.0
      %877 = vmatpush1.msra.mxu0 0.0
      %878 = vmatprep.subr.mxu0 0.0
      %879 = vmatpush1.msra.mxu0 0.0
      %880 = vmatprep.subr.mxu0 0.0
      %881 = vmatpush1.msra.mxu0 0.0
      %882 = vmatprep.subr.mxu0 0.0
      %883 = vmatpush1.msra.mxu0 0.0
      %884 = vmatprep.subr.mxu0 0.0
      %885 = vmatpush1.msra.mxu0 0.0
      %886 = vmatprep.subr.mxu0 0.0
      %887 = vmatpush1.msra.mxu0 0.0
      %888 = vmatprep.subr.mxu0 0.0
      %889 = vmatpush1.msra.mxu0 0.0
      %890 = vmatprep.subr.mxu0 0.0
      %891 = vmatpush1.msra.mxu0 0.0
      %892 = vmatprep.subr.mxu0 0.0
      %893 = vmatpush1.msra.mxu0 0.0
      %894 = vmatprep.subr.mxu0 0.0
      %895 = vmatpush1.msra.mxu0 0.0
      %896 = vmatprep.subr.mxu0 0.0
      %897 = vmatpush1.msra.mxu0 0.0
      %898 = vmatprep.subr.mxu0 0.0
      %899 = vmatpush1.msra.mxu0 0.0
      %900 = vmatprep.subr.mxu0 0.0
      %901 = vmatpush1.msra.mxu0 0.0
      %902 = vmatprep.subr.mxu0 0.0
      %903 = vmatpush1.msra.mxu0 0.0
      %904 = vmatprep.subr.mxu0 0.0
      %905 = vmatpush1.msra.mxu0 0.0
      %906 = vmatprep.subr.mxu0 0.0
      %907 = vmatpush1.msra.mxu0 0.0
      %908 = vmatprep.subr.mxu0 0.0
      %909 = vmatpush1.msra.mxu0 0.0
      %910 = vmatprep.mubr.f32.mxu0 0.0
      %911 = vmatmul.mubr.f32.gmra.mrb[0].mxu0 %v844
      %v912 = vpop.f32.mrb[0].mxu0
      %v913 = vadd.f32 0.0, %v912
      %v914 = vpop.f32.mrb[0].mxu0
      %v915 = vadd.f32 0.0, %v914
      %916 = vdwg.mxu0
      %v917 = vld [vmem:[%s8] sm:$0xff]
      %919 = vset.pattern.permute.xlu0 0
      %920 = vperm.xlu0 %919, %v917
      %v921 = vpop.permute.xlu0 %920
      %v923 = vmul.f32 %v913, %v921
      %v924 = vmul.f32 %v915, %v921
      %v925 = vld [vmem:[%s7] sm:$0xff]
      %927 = vset.pattern.permute.xlu0 0
      %928 = vperm.xlu0 %927, %v925
      %v929 = vpop.permute.xlu0 %928
      %v931 = vadd.f32 %v923, %v929
      %v932 = vadd.f32 %v924, %v929
      %935 = vrot.lane.b32.xlu0 %v839, 17
      %v936 = vpop.permute.xlu0 %935
      %937 = vrot.lane.b32.xlu0 %v840, 17
      %v938 = vpop.permute.xlu0 %937
      %v939 = vsel %vm649, %v644, %v936
      %v940 = vsel %vm649, %v936, %v938
      %v943 = vsel %vm638, %v939, 0.0
      %v944 = vsel %vm639, %v940, 0.0
      %945 = vrot.lane.b32.xlu0 %v839, 15
      %v946 = vpop.permute.xlu0 %945
      %947 = vrot.lane.b32.xlu0 %v840, 15
      %v948 = vpop.permute.xlu0 %947
      %v949 = vsel %vm666, %v661, %v946
      %v950 = vsel %vm666, %v946, %v948
      %v953 = vsel %vm658, %v949, 0.0
      %v954 = vsel %vm659, %v950, 0.0
      %955 = vrot.lane.b32.xlu0 %v839, 1
      %v956 = vpop.permute.xlu0 %955
      %957 = vrot.lane.b32.xlu0 %v840, 1
      %v958 = vpop.permute.xlu0 %957
      %v959 = vsel %vm679, %v674, %v956
      %v960 = vsel %vm679, %v956, %v958
      %v963 = vsel %vm638, %v959, 0.0
      %v964 = vsel %vm639, %v960, 0.0
      %965 = vrot.lane.b32.xlu0 %v839, 127
      %v966 = vpop.permute.xlu0 %965
      %967 = vrot.lane.b32.xlu0 %v840, 127
      %v968 = vpop.permute.xlu0 %967
      %v969 = vsel %vm692, %v966, %v968
      %v970 = vsel %vm692, %v968, %v691
      %v973 = vsel %vm658, %v969, 0.0
      %v974 = vsel %vm659, %v970, 0.0
      %975 = vrot.lane.b32.xlu0 %v839, 113
      %v976 = vpop.permute.xlu0 %975
      %977 = vrot.lane.b32.xlu0 %v840, 113
      %v978 = vpop.permute.xlu0 %977
      %v979 = vsel %vm705, %v976, %v978
      %v980 = vsel %vm705, %v978, %v704
      %v983 = vsel %vm638, %v979, 0.0
      %v984 = vsel %vm639, %v980, 0.0
      %985 = vrot.lane.b32.xlu0 %v839, 111
      %v986 = vpop.permute.xlu0 %985
      %987 = vrot.lane.b32.xlu0 %v840, 111
      %v988 = vpop.permute.xlu0 %987
      %v989 = vsel %vm718, %v986, %v988
      %v990 = vsel %vm718, %v988, %v717
      %v993 = vsel %vm658, %v989, 0.0
      %v994 = vsel %vm659, %v990, 0.0
      %995 = vrot.lane.b32.xlu0 %v839, 16
      %v996 = vpop.permute.xlu0 %995
      %997 = vrot.lane.b32.xlu0 %v840, 16
      %v998 = vpop.permute.xlu0 %997
      %v999 = vsel %vm731, %v726, %v996
      %v1000 = vsel %vm731, %v996, %v998
      %1003 = vrot.lane.b32.xlu0 %v839, 112
      %v1004 = vpop.permute.xlu0 %1003
      %1005 = vrot.lane.b32.xlu0 %v840, 112
      %v1006 = vpop.permute.xlu0 %1005
      %v1007 = vsel %vm742, %v1004, %v1006
      %v1008 = vsel %vm742, %v1006, %v741
      %v1011 = vld [vmem:[%s6] sm:$0xff]
      %v1013 = vsel %vm748, %v1011, 0
      %1015 = vmatprep.subr.mxu0 %v944
      %1016 = vmatpush1.msra.mxu0 %v943
      %1017 = vmatprep.subr.mxu0 %v1000
      %1018 = vmatpush1.msra.mxu0 %v999
      %1019 = vmatprep.subr.mxu0 %v954
      %1020 = vmatpush1.msra.mxu0 %v953
      %1021 = vmatprep.subr.mxu0 %v964
      %1022 = vmatpush1.msra.mxu0 %v963
      %1023 = vmatprep.subr.mxu0 %v840
      %1024 = vmatpush1.msra.mxu0 %v839
      %1025 = vmatprep.subr.mxu0 %v974
      %1026 = vmatpush1.msra.mxu0 %v973
      %1027 = vmatprep.subr.mxu0 %v984
      %1028 = vmatpush1.msra.mxu0 %v983
      %1029 = vmatprep.subr.mxu0 %v1008
      %1030 = vmatpush1.msra.mxu0 %v1007
      %1031 = vmatprep.subr.mxu0 %v994
      %1032 = vmatpush1.msra.mxu0 %v993
      %1033 = vmatprep.subr.mxu0 0.0
      %1034 = vmatpush1.msra.mxu0 0.0
      %1035 = vmatprep.subr.mxu0 0.0
      %1036 = vmatpush1.msra.mxu0 0.0
      %1037 = vmatprep.subr.mxu0 0.0
      %1038 = vmatpush1.msra.mxu0 0.0
      %1039 = vmatprep.subr.mxu0 0.0
      %1040 = vmatpush1.msra.mxu0 0.0
      %1041 = vmatprep.subr.mxu0 0.0
      %1042 = vmatpush1.msra.mxu0 0.0
      %1043 = vmatprep.subr.mxu0 0.0
      %1044 = vmatpush1.msra.mxu0 0.0
      %1045 = vmatprep.subr.mxu0 0.0
      %1046 = vmatpush1.msra.mxu0 0.0
      %1047 = vmatprep.subr.mxu0 0.0
      %1048 = vmatpush1.msra.mxu0 0.0
      %1049 = vmatprep.subr.mxu0 0.0
      %1050 = vmatpush1.msra.mxu0 0.0
      %1051 = vmatprep.subr.mxu0 0.0
      %1052 = vmatpush1.msra.mxu0 0.0
      %1053 = vmatprep.subr.mxu0 0.0
      %1054 = vmatpush1.msra.mxu0 0.0
      %1055 = vmatprep.subr.mxu0 0.0
      %1056 = vmatpush1.msra.mxu0 0.0
      %1057 = vmatprep.subr.mxu0 0.0
      %1058 = vmatpush1.msra.mxu0 0.0
      %1059 = vmatprep.subr.mxu0 0.0
      %1060 = vmatpush1.msra.mxu0 0.0
      %1061 = vmatprep.subr.mxu0 0.0
      %1062 = vmatpush1.msra.mxu0 0.0
      %1063 = vmatprep.subr.mxu0 0.0
      %1064 = vmatpush1.msra.mxu0 0.0
      %1065 = vmatprep.subr.mxu0 0.0
      %1066 = vmatpush1.msra.mxu0 0.0
      %1067 = vmatprep.subr.mxu0 0.0
      %1068 = vmatpush1.msra.mxu0 0.0
      %1069 = vmatprep.subr.mxu0 0.0
      %1070 = vmatpush1.msra.mxu0 0.0
      %1071 = vmatprep.subr.mxu0 0.0
      %1072 = vmatpush1.msra.mxu0 0.0
      %1073 = vmatprep.subr.mxu0 0.0
      %1074 = vmatpush1.msra.mxu0 0.0
      %1075 = vmatprep.subr.mxu0 0.0
      %1076 = vmatpush1.msra.mxu0 0.0
      %1077 = vmatprep.subr.mxu0 0.0
      %1078 = vmatpush1.msra.mxu0 0.0
      %1079 = vmatprep.mubr.f32.mxu0 0.0
      %1080 = vmatmul.mubr.f32.gmra.mrb[0].mxu0 %v1013
      %v1081 = vpop.f32.mrb[0].mxu0
      %v1082 = vadd.f32 0.0, %v1081
      %v1083 = vpop.f32.mrb[0].mxu0
      %v1084 = vadd.f32 0.0, %v1083
      %1085 = vdwg.mxu0
      %v1086 = vld [vmem:[%s4] sm:$0xff]
      %1088 = vset.pattern.permute.xlu0 0
      %1089 = vperm.xlu0 %1088, %v1086
      %v1090 = vpop.permute.xlu0 %1089
      %v1092 = vmul.f32 %v1082, %v1090
      %v1093 = vmul.f32 %v1084, %v1090
      %v1094 = vld [vmem:[%s3] sm:$0xff]
      %1096 = vset.pattern.permute.xlu0 0
      %1097 = vperm.xlu0 %1096, %v1094
      %v1098 = vpop.permute.xlu0 %1097
      %v1100 = vadd.f32 %v1092, %v1098
      %v1101 = vadd.f32 %v1093, %v1098
      %v1102 = vadd.f32 %v1100, %v931
      %v1103 = vadd.f32 %v1101, %v932
      %v1104 = vmax.f32 %v1102, 0.0
      %v1105 = vmax.f32 %v1103, 0.0
      %1108 = vrot.lane.b32.xlu0 %v1104, 17
      %v1109 = vpop.permute.xlu0 %1108
      %1110 = vrot.lane.b32.xlu0 %v1105, 17
      %v1111 = vpop.permute.xlu0 %1110
      %v1112 = vsel %vm649, %v644, %v1109
      %v1113 = vsel %vm649, %v1109, %v1111
      %v1116 = vsel %vm638, %v1112, 0.0
      %v1117 = vsel %vm639, %v1113, 0.0
      %1118 = vrot.lane.b32.xlu0 %v1104, 15
      %v1119 = vpop.permute.xlu0 %1118
      %1120 = vrot.lane.b32.xlu0 %v1105, 15
      %v1121 = vpop.permute.xlu0 %1120
      %v1122 = vsel %vm666, %v661, %v1119
      %v1123 = vsel %vm666, %v1119, %v1121
      %v1126 = vsel %vm658, %v1122, 0.0
      %v1127 = vsel %vm659, %v1123, 0.0
      %1128 = vrot.lane.b32.xlu0 %v1104, 1
      %v1129 = vpop.permute.xlu0 %1128
      %1130 = vrot.lane.b32.xlu0 %v1105, 1
      %v1131 = vpop.permute.xlu0 %1130
      %v1132 = vsel %vm679, %v674, %v1129
      %v1133 = vsel %vm679, %v1129, %v1131
      %v1136 = vsel %vm638, %v1132, 0.0
      %v1137 = vsel %vm639, %v1133, 0.0
      %1138 = vrot.lane.b32.xlu0 %v1104, 127
      %v1139 = vpop.permute.xlu0 %1138
      %1140 = vrot.lane.b32.xlu0 %v1105, 127
      %v1141 = vpop.permute.xlu0 %1140
      %v1142 = vsel %vm692, %v1139, %v1141
      %v1143 = vsel %vm692, %v1141, %v691
      %v1146 = vsel %vm658, %v1142, 0.0
      %v1147 = vsel %vm659, %v1143, 0.0
      %1148 = vrot.lane.b32.xlu0 %v1104, 113
      %v1149 = vpop.permute.xlu0 %1148
      %1150 = vrot.lane.b32.xlu0 %v1105, 113
      %v1151 = vpop.permute.xlu0 %1150
      %v1152 = vsel %vm705, %v1149, %v1151
      %v1153 = vsel %vm705, %v1151, %v704
      %v1156 = vsel %vm638, %v1152, 0.0
      %v1157 = vsel %vm639, %v1153, 0.0
      %1158 = vrot.lane.b32.xlu0 %v1104, 111
      %v1159 = vpop.permute.xlu0 %1158
      %1160 = vrot.lane.b32.xlu0 %v1105, 111
      %v1161 = vpop.permute.xlu0 %1160
      %v1162 = vsel %vm718, %v1159, %v1161
      %v1163 = vsel %vm718, %v1161, %v717
      %v1166 = vsel %vm658, %v1162, 0.0
      %v1167 = vsel %vm659, %v1163, 0.0
      %1168 = vrot.lane.b32.xlu0 %v1104, 16
      %v1169 = vpop.permute.xlu0 %1168
      %1170 = vrot.lane.b32.xlu0 %v1105, 16
      %v1171 = vpop.permute.xlu0 %1170
      %v1172 = vsel %vm731, %v726, %v1169
      %v1173 = vsel %vm731, %v1169, %v1171
      %1176 = vrot.lane.b32.xlu0 %v1104, 112
      %v1177 = vpop.permute.xlu0 %1176
      %1178 = vrot.lane.b32.xlu0 %v1105, 112
      %v1179 = vpop.permute.xlu0 %1178
      %v1180 = vsel %vm742, %v1177, %v1179
      %v1181 = vsel %vm742, %v1179, %v741
      %v1184 = vld [vmem:[%s14] sm:$0xff]
      %v1186 = vsel %vm748, %v1184, 0
      %1188 = vmatprep.subr.mxu0 %v1117
      %1189 = vmatpush1.msra.mxu0 %v1116
      %1190 = vmatprep.subr.mxu0 %v1173
      %1191 = vmatpush1.msra.mxu0 %v1172
      %1192 = vmatprep.subr.mxu0 %v1127
      %1193 = vmatpush1.msra.mxu0 %v1126
      %1194 = vmatprep.subr.mxu0 %v1137
      %1195 = vmatpush1.msra.mxu0 %v1136
      %1196 = vmatprep.subr.mxu0 %v1105
      %1197 = vmatpush1.msra.mxu0 %v1104
      %1198 = vmatprep.subr.mxu0 %v1147
      %1199 = vmatpush1.msra.mxu0 %v1146
      %1200 = vmatprep.subr.mxu0 %v1157
      %1201 = vmatpush1.msra.mxu0 %v1156
      %1202 = vmatprep.subr.mxu0 %v1181
      %1203 = vmatpush1.msra.mxu0 %v1180
      %1204 = vmatprep.subr.mxu0 %v1167
      %1205 = vmatpush1.msra.mxu0 %v1166
      %1206 = vmatprep.subr.mxu0 0.0
      %1207 = vmatpush1.msra.mxu0 0.0
      %1208 = vmatprep.subr.mxu0 0.0
      %1209 = vmatpush1.msra.mxu0 0.0
      %1210 = vmatprep.subr.mxu0 0.0
      %1211 = vmatpush1.msra.mxu0 0.0
      %1212 = vmatprep.subr.mxu0 0.0
      %1213 = vmatpush1.msra.mxu0 0.0
      %1214 = vmatprep.subr.mxu0 0.0
      %1215 = vmatpush1.msra.mxu0 0.0
      %1216 = vmatprep.subr.mxu0 0.0
      %1217 = vmatpush1.msra.mxu0 0.0
      %1218 = vmatprep.subr.mxu0 0.0
      %1219 = vmatpush1.msra.mxu0 0.0
      %1220 = vmatprep.subr.mxu0 0.0
      %1221 = vmatpush1.msra.mxu0 0.0
      %1222 = vmatprep.subr.mxu0 0.0
      %1223 = vmatpush1.msra.mxu0 0.0
      %1224 = vmatprep.subr.mxu0 0.0
      %1225 = vmatpush1.msra.mxu0 0.0
      %1226 = vmatprep.subr.mxu0 0.0
      %1227 = vmatpush1.msra.mxu0 0.0
      %1228 = vmatprep.subr.mxu0 0.0
      %1229 = vmatpush1.msra.mxu0 0.0
      %1230 = vmatprep.subr.mxu0 0.0
      %1231 = vmatpush1.msra.mxu0 0.0
      %1232 = vmatprep.subr.mxu0 0.0
      %1233 = vmatpush1.msra.mxu0 0.0
      %1234 = vmatprep.subr.mxu0 0.0
      %1235 = vmatpush1.msra.mxu0 0.0
      %1236 = vmatprep.subr.mxu0 0.0
      %1237 = vmatpush1.msra.mxu0 0.0
      %1238 = vmatprep.subr.mxu0 0.0
      %1239 = vmatpush1.msra.mxu0 0.0
      %1240 = vmatprep.subr.mxu0 0.0
      %1241 = vmatpush1.msra.mxu0 0.0
      %1242 = vmatprep.subr.mxu0 0.0
      %1243 = vmatpush1.msra.mxu0 0.0
      %1244 = vmatprep.subr.mxu0 0.0
      %1245 = vmatpush1.msra.mxu0 0.0
      %1246 = vmatprep.subr.mxu0 0.0
      %1247 = vmatpush1.msra.mxu0 0.0
      %1248 = vmatprep.subr.mxu0 0.0
      %1249 = vmatpush1.msra.mxu0 0.0
      %1250 = vmatprep.subr.mxu0 0.0
      %1251 = vmatpush1.msra.mxu0 0.0
      %1252 = vmatprep.mubr.f32.mxu0 0.0
      %1253 = vmatmul.mubr.f32.gmra.mrb[0].mxu0 %v1186
      %v1254 = vpop.f32.mrb[0].mxu0
      %v1255 = vadd.f32 0.0, %v1254
      %v1256 = vpop.f32.mrb[0].mxu0
      %v1257 = vadd.f32 0.0, %v1256
      %1258 = vdwg.mxu0
      %v1259 = vld [vmem:[%s11] sm:$0xff]
      %1261 = vset.pattern.permute.xlu0 0
      %1262 = vperm.xlu0 %1261, %v1259
      %v1263 = vpop.permute.xlu0 %1262
      %v1265 = vmul.f32 %v1255, %v1263
      %v1266 = vmul.f32 %v1257, %v1263
      %v1267 = vld [vmem:[%s10] sm:$0xff]
      %1269 = vset.pattern.permute.xlu0 0
      %1270 = vperm.xlu0 %1269, %v1267
      %v1271 = vpop.permute.xlu0 %1270
      %v1273 = vadd.f32 %v1265, %v1271
      %v1274 = vadd.f32 %v1266, %v1271
      %v1275 = vmax.f32 %v1273, 0.0
      %v1276 = vmax.f32 %v1274, 0.0
      %1279 = vrot.lane.b32.xlu0 %v1275, 17
      %v1280 = vpop.permute.xlu0 %1279
      %1281 = vrot.lane.b32.xlu0 %v1276, 17
      %v1282 = vpop.permute.xlu0 %1281
      %v1283 = vsel %vm649, %v644, %v1280
      %v1284 = vsel %vm649, %v1280, %v1282
      %v1287 = vsel %vm638, %v1283, 0.0
      %v1288 = vsel %vm639, %v1284, 0.0
      %1289 = vrot.lane.b32.xlu0 %v1275, 15
      %v1290 = vpop.permute.xlu0 %1289
      %1291 = vrot.lane.b32.xlu0 %v1276, 15
      %v1292 = vpop.permute.xlu0 %1291
      %v1293 = vsel %vm666, %v661, %v1290
      %v1294 = vsel %vm666, %v1290, %v1292
      %v1297 = vsel %vm658, %v1293, 0.0
      %v1298 = vsel %vm659, %v1294, 0.0
      %1299 = vrot.lane.b32.xlu0 %v1275, 1
      %v1300 = vpop.permute.xlu0 %1299
      %1301 = vrot.lane.b32.xlu0 %v1276, 1
      %v1302 = vpop.permute.xlu0 %1301
      %v1303 = vsel %vm679, %v674, %v1300
      %v1304 = vsel %vm679, %v1300, %v1302
      %v1307 = vsel %vm638, %v1303, 0.0
      %v1308 = vsel %vm639, %v1304, 0.0
      %1309 = vrot.lane.b32.xlu0 %v1275, 127
      %v1310 = vpop.permute.xlu0 %1309
      %1311 = vrot.lane.b32.xlu0 %v1276, 127
      %v1312 = vpop.permute.xlu0 %1311
      %v1313 = vsel %vm692, %v1310, %v1312
      %v1314 = vsel %vm692, %v1312, %v691
      %v1317 = vsel %vm658, %v1313, 0.0
      %v1318 = vsel %vm659, %v1314, 0.0
      %1319 = vrot.lane.b32.xlu0 %v1275, 113
      %v1320 = vpop.permute.xlu0 %1319
      %1321 = vrot.lane.b32.xlu0 %v1276, 113
      %v1322 = vpop.permute.xlu0 %1321
      %v1323 = vsel %vm705, %v1320, %v1322
      %v1324 = vsel %vm705, %v1322, %v704
      %v1327 = vsel %vm638, %v1323, 0.0
      %v1328 = vsel %vm639, %v1324, 0.0
      %1329 = vrot.lane.b32.xlu0 %v1275, 111
      %v1330 = vpop.permute.xlu0 %1329
      %1331 = vrot.lane.b32.xlu0 %v1276, 111
      %v1332 = vpop.permute.xlu0 %1331
      %v1333 = vsel %vm718, %v1330, %v1332
      %v1334 = vsel %vm718, %v1332, %v717
      %v1337 = vsel %vm658, %v1333, 0.0
      %v1338 = vsel %vm659, %v1334, 0.0
      %1339 = vrot.lane.b32.xlu0 %v1275, 16
      %v1340 = vpop.permute.xlu0 %1339
      %1341 = vrot.lane.b32.xlu0 %v1276, 16
      %v1342 = vpop.permute.xlu0 %1341
      %v1343 = vsel %vm731, %v726, %v1340
      %v1344 = vsel %vm731, %v1340, %v1342
      %1347 = vrot.lane.b32.xlu0 %v1275, 112
      %v1348 = vpop.permute.xlu0 %1347
      %1349 = vrot.lane.b32.xlu0 %v1276, 112
      %v1350 = vpop.permute.xlu0 %1349
      %v1351 = vsel %vm742, %v1348, %v1350
      %v1352 = vsel %vm742, %v1350, %v741
      %v1355 = vld [vmem:[%s15] sm:$0xff]
      %v1357 = vsel %vm748, %v1355, 0
      %1359 = vmatprep.subr.mxu0 %v1288
      %1360 = vmatpush1.msra.mxu0 %v1287
      %1361 = vmatprep.subr.mxu0 %v1344
      %1362 = vmatpush1.msra.mxu0 %v1343
      %1363 = vmatprep.subr.mxu0 %v1298
      %1364 = vmatpush1.msra.mxu0 %v1297
      %1365 = vmatprep.subr.mxu0 %v1308
      %1366 = vmatpush1.msra.mxu0 %v1307
      %1367 = vmatprep.subr.mxu0 %v1276
      %1368 = vmatpush1.msra.mxu0 %v1275
      %1369 = vmatprep.subr.mxu0 %v1318
      %1370 = vmatpush1.msra.mxu0 %v1317
      %1371 = vmatprep.subr.mxu0 %v1328
      %1372 = vmatpush1.msra.mxu0 %v1327
      %1373 = vmatprep.subr.mxu0 %v1352
      %1374 = vmatpush1.msra.mxu0 %v1351
      %1375 = vmatprep.subr.mxu0 %v1338
      %1376 = vmatpush1.msra.mxu0 %v1337
      %1377 = vmatprep.subr.mxu0 0.0
      %1378 = vmatpush1.msra.mxu0 0.0
      %1379 = vmatprep.subr.mxu0 0.0
      %1380 = vmatpush1.msra.mxu0 0.0
      %1381 = vmatprep.subr.mxu0 0.0
      %1382 = vmatpush1.msra.mxu0 0.0
      %1383 = vmatprep.subr.mxu0 0.0
      %1384 = vmatpush1.msra.mxu0 0.0
      %1385 = vmatprep.subr.mxu0 0.0
      %1386 = vmatpush1.msra.mxu0 0.0
      %1387 = vmatprep.subr.mxu0 0.0
      %1388 = vmatpush1.msra.mxu0 0.0
      %1389 = vmatprep.subr.mxu0 0.0
      %1390 = vmatpush1.msra.mxu0 0.0
      %1391 = vmatprep.subr.mxu0 0.0
      %1392 = vmatpush1.msra.mxu0 0.0
      %1393 = vmatprep.subr.mxu0 0.0
      %1394 = vmatpush1.msra.mxu0 0.0
      %1395 = vmatprep.subr.mxu0 0.0
      %1396 = vmatpush1.msra.mxu0 0.0
      %1397 = vmatprep.subr.mxu0 0.0
      %1398 = vmatpush1.msra.mxu0 0.0
      %1399 = vmatprep.subr.mxu0 0.0
      %1400 = vmatpush1.msra.mxu0 0.0
      %1401 = vmatprep.subr.mxu0 0.0
      %1402 = vmatpush1.msra.mxu0 0.0
      %1403 = vmatprep.subr.mxu0 0.0
      %1404 = vmatpush1.msra.mxu0 0.0
      %1405 = vmatprep.subr.mxu0 0.0
      %1406 = vmatpush1.msra.mxu0 0.0
      %1407 = vmatprep.subr.mxu0 0.0
      %1408 = vmatpush1.msra.mxu0 0.0
      %1409 = vmatprep.subr.mxu0 0.0
      %1410 = vmatpush1.msra.mxu0 0.0
      %1411 = vmatprep.subr.mxu0 0.0
      %1412 = vmatpush1.msra.mxu0 0.0
      %1413 = vmatprep.subr.mxu0 0.0
      %1414 = vmatpush1.msra.mxu0 0.0
      %1415 = vmatprep.subr.mxu0 0.0
      %1416 = vmatpush1.msra.mxu0 0.0
      %1417 = vmatprep.subr.mxu0 0.0
      %1418 = vmatpush1.msra.mxu0 0.0
      %1419 = vmatprep.subr.mxu0 0.0
      %1420 = vmatpush1.msra.mxu0 0.0
      %1421 = vmatprep.subr.mxu0 0.0
      %1422 = vmatpush1.msra.mxu0 0.0
      %1423 = vmatprep.mubr.f32.mxu0 0.0
      %1424 = vmatmul.mubr.f32.gmra.mrb[0].mxu0 %v1357
      %v1425 = vpop.f32.mrb[0].mxu0
      %v1426 = vadd.f32 0.0, %v1425
      %v1427 = vpop.f32.mrb[0].mxu0
      %v1428 = vadd.f32 0.0, %v1427
      %1429 = vdwg.mxu0
      %v1430 = vld [vmem:[%s13] sm:$0xff]
      %1432 = vset.pattern.permute.xlu0 0
      %1433 = vperm.xlu0 %1432, %v1430
      %v1434 = vpop.permute.xlu0 %1433
      %v1436 = vmul.f32 %v1426, %v1434
      %v1437 = vmul.f32 %v1428, %v1434
      %v1438 = vld [vmem:[%s12] sm:$0xff]
      %1440 = vset.pattern.permute.xlu0 0
      %1441 = vperm.xlu0 %1440, %v1438
      %v1442 = vpop.permute.xlu0 %1441
      %v1444 = vadd.f32 %v1436, %v1442
      %v1445 = vadd.f32 %v1437, %v1442
      %v1446 = vadd.f32 %v1444, %v1104
      %v1447 = vadd.f32 %v1445, %v1105
      %v1448 = vmax.f32 %v1446, 0.0
      %v1449 = vmax.f32 %v1447, 0.0
      %v1450 = vld [vmem:[%s18] sm:$0xff]
      %v1452 = vsel %vm731, %v1450, 0
      %1454 = vmatprep.subr.mxu0 %v1105
      %1455 = vmatpush1.msra.mxu0 %v1104
      %1456 = vmatprep.subr.mxu0 %v1449
      %1457 = vmatpush1.msra.mxu0 %v1448
      %1458 = vmatprep.subr.mxu0 0.0
      %1459 = vmatpush1.msra.mxu0 0.0
      %1460 = vmatprep.subr.mxu0 0.0
      %1461 = vmatpush1.msra.mxu0 0.0
      %1462 = vmatprep.subr.mxu0 0.0
      %1463 = vmatpush1.msra.mxu0 0.0
      %1464 = vmatprep.subr.mxu0 0.0
      %1465 = vmatpush1.msra.mxu0 0.0
      %1466 = vmatprep.subr.mxu0 0.0
      %1467 = vmatpush1.msra.mxu0 0.0
      %1468 = vmatprep.subr.mxu0 0.0
      %1469 = vmatpush1.msra.mxu0 0.0
      %1470 = vmatprep.subr.mxu0 0.0
      %1471 = vmatpush1.msra.mxu0 0.0
      %1472 = vmatprep.subr.mxu0 0.0
      %1473 = vmatpush1.msra.mxu0 0.0
      %1474 = vmatprep.subr.mxu0 0.0
      %1475 = vmatpush1.msra.mxu0 0.0
      %1476 = vmatprep.subr.mxu0 0.0
      %1477 = vmatpush1.msra.mxu0 0.0
      %1478 = vmatprep.subr.mxu0 0.0
      %1479 = vmatpush1.msra.mxu0 0.0
      %1480 = vmatprep.subr.mxu0 0.0
      %1481 = vmatpush1.msra.mxu0 0.0
      %1482 = vmatprep.subr.mxu0 0.0
      %1483 = vmatpush1.msra.mxu0 0.0
      %1484 = vmatprep.subr.mxu0 0.0
      %1485 = vmatpush1.msra.mxu0 0.0
      %1486 = vmatprep.subr.mxu0 0.0
      %1487 = vmatpush1.msra.mxu0 0.0
      %1488 = vmatprep.subr.mxu0 0.0
      %1489 = vmatpush1.msra.mxu0 0.0
      %1490 = vmatprep.subr.mxu0 0.0
      %1491 = vmatpush1.msra.mxu0 0.0
      %1492 = vmatprep.subr.mxu0 0.0
      %1493 = vmatpush1.msra.mxu0 0.0
      %1494 = vmatprep.subr.mxu0 0.0
      %1495 = vmatpush1.msra.mxu0 0.0
      %1496 = vmatprep.subr.mxu0 0.0
      %1497 = vmatpush1.msra.mxu0 0.0
      %1498 = vmatprep.subr.mxu0 0.0
      %1499 = vmatpush1.msra.mxu0 0.0
      %1500 = vmatprep.subr.mxu0 0.0
      %1501 = vmatpush1.msra.mxu0 0.0
      %1502 = vmatprep.subr.mxu0 0.0
      %1503 = vmatpush1.msra.mxu0 0.0
      %1504 = vmatprep.subr.mxu0 0.0
      %1505 = vmatpush1.msra.mxu0 0.0
      %1506 = vmatprep.subr.mxu0 0.0
      %1507 = vmatpush1.msra.mxu0 0.0
      %1508 = vmatprep.subr.mxu0 0.0
      %1509 = vmatpush1.msra.mxu0 0.0
      %1510 = vmatprep.subr.mxu0 0.0
      %1511 = vmatpush1.msra.mxu0 0.0
      %1512 = vmatprep.subr.mxu0 0.0
      %1513 = vmatpush1.msra.mxu0 0.0
      %1514 = vmatprep.subr.mxu0 0.0
      %1515 = vmatpush1.msra.mxu0 0.0
      %1516 = vmatprep.subr.mxu0 0.0
      %1517 = vmatpush1.msra.mxu0 0.0
      %1518 = vmatprep.mubr.f32.mxu0 0.0
      %1519 = vmatmul.mubr.f32.gmra.mrb[0].mxu0 %v1452
      %v1520 = vpop.f32.mrb[0].mxu0
      %v1521 = vadd.f32 0.0, %v1520
      %v1522 = vpop.f32.mrb[0].mxu0
      %v1523 = vadd.f32 0.0, %v1522
      %1524 = vdwg.mxu0
      %v1525 = vld [vmem:[%s17] sm:$0xff]
      %1527 = vset.pattern.permute.xlu0 0
      %1528 = vperm.xlu0 %1527, %v1525
      %v1529 = vpop.permute.xlu0 %1528
      %v1531 = vmul.f32 %v1521, %v1529
      %v1532 = vmul.f32 %v1523, %v1529
      %v1533 = vld [vmem:[%s16] sm:$0xff]
      %1535 = vset.pattern.permute.xlu0 0
      %1536 = vperm.xlu0 %1535, %v1533
      %v1537 = vpop.permute.xlu0 %1536
      %v1539 = vadd.f32 %v1531, %v1537
      %v1540 = vadd.f32 %v1532, %v1537
      %v1541 = vmax.f32 %v1539, 0.0
      %v1542 = vmax.f32 %v1540, 0.0
      %1543 = vst [vmem:[%s602] sm:$0xff] %v1541
      %1544 = vst [vmem:[%s602 + $0x8] sm:$0xff] %v1542
      %p1545 = scmp.lt.s32.totalorder %s30, 1
      %s1546 = scalar_select %p1545, %s30, 1
      %s1547 = smul.addr %s1546, 2
      %s1548 = smul.addr %s1547, 8
      %s1549 = scalar_lea.vmem %s19, %s1548
      // Predicated region
      $region97: #{tree_forward.1} parent=95 // pred_check
        %p1550 = pneg %p452
      $region98: #{tree_forward.1} parent=95 // pred_check_branch
        %1552 = sbr.rel (%p1550) target = $region100
      $region99: #{tree_forward.1} parent=95 // pred_region
        _
      $region100: #{tree_forward.1} parent=95 // pred_fallthru
        _
    $region96: #{tree_forward.1} parent=5 // pred_fallthru
      _
    %p1553 = scmp.le.s32.totalorder 2, %s25
    // Predicated region
    $region101: #{tree_forward.1} parent=5 // pred_check
      %p1554 = pneg %p1553
    $region102: #{tree_forward.1} parent=5 // pred_check_branch
      %1556 = sbr.rel (%p1554) target = $region104
    $region103: #{tree_forward.1} parent=5 // pred_region
      %s1557 = ssub.s32 %s25, 2
      // Predicated region
      $region105: #{tree_forward.1} parent=103 // pred_check
        %p1558 = pneg %p458
      $region106: #{tree_forward.1} parent=103 // pred_check_branch
        %1560 = sbr.rel (%p1558) target = $region108
      $region107: #{tree_forward.1} parent=103 // pred_region
        %p1561 = scmp.lt.s32.totalorder %s31, 1
        %s1562 = scalar_select %p1561, %s31, 1
        %s1563 = smul.addr %s1562, 2
        %s1564 = smul.addr %s1563, 8
        %s1565 = scalar_lea.vmem %s19, %s1564
      $region108: #{tree_forward.1} parent=103 // pred_fallthru
        _
    $region104: #{tree_forward.1} parent=5 // pred_fallthru
      _
  $region6: #{tree_forward.1} parent=0 // loop_footer
    %s29 = sadd.s32 1, %s25
  $region7: #{tree_forward.1} parent=0 // loop_footer_branch
    %24 = sbr.rel target = $region3
  $region8: #{tree_forward.1} parent=0 // loop_exit
    _

</llo_original>
